<compile_context>
chip_gen: v7x
topology: tpu7x:2x2x1
jax: 0.10.0
libtpu: 0.0.40
codegen_flags: <defaults>
</compile_context>

<pallas_src>
import jax
import jax.numpy as jnp
from jax.experimental import pallas as pl
from jax.experimental.pallas import tpu as pltpu


def _mul_conv1x1_kernel(x_ref, s_ref, w_ref, o_ref):
    # x_ref: (1, Cin, HW)    bf16  activation slab for this batch (resident across Cout axis)
    # s_ref: (1, 1, Cin)     f32   per-(batch, channel) scale
    # w_ref: (Co_blk, Cin)   bf16  1x1-conv weight slice for this Cout block
    # o_ref: (1, Co_blk, HW) f32
    #
    # Fold the per-channel scale into the weight operand; multiply in f32
    # (v5e-friendly), cast back to bf16 for the MXU.
    w_scaled = (w_ref[...].astype(jnp.float32) * s_ref[0]).astype(jnp.bfloat16)
    # 1x1 conv in NCHW orientation: out = W_scaled[Cout, Cin] @ X[Cin, HW] on the MXU.
    o_ref[0] = jnp.dot(w_scaled, x_ref[0],
                       preferred_element_type=jnp.float32).astype(o_ref.dtype)


def mul_conv2d_1x1(x_nchw, scale_nc11, weight_oi11):
    """Fused (x * scale) followed by 1x1 conv (no bias), computed in NCHW orientation.

    x_nchw:      (N, Cin, H, W)    float32
    scale_nc11:  (N, Cin, 1, 1)    float32
    weight_oi11: (Cout, Cin, 1, 1) float32   (PyTorch Conv2d weight layout)
    returns:     (N, Cout, H, W)   float32
    """
    N, Cin, H, W = x_nchw.shape
    Cout = weight_oi11.shape[0]
    HW = H * W

    # Glue (reshapes + dtype casts only — no transposes):
    x = x_nchw.reshape(N, Cin, HW).astype(jnp.bfloat16)        # (N, Cin, HW)
    s = scale_nc11.reshape(N, 1, Cin)                          # (N, 1, Cin), stays f32
    w = weight_oi11.reshape(Cout, Cin).astype(jnp.bfloat16)    # (Cout, Cin) — W@X needs no transpose

    # Split Cout so both TensorCores get work on v7x (harmless on v5e/v6e).
    co_blk = Cout // 2 if (Cout % 16 == 0 and Cout >= 32) else Cout
    n_co = Cout // co_blk

    out = pl.pallas_call(
        _mul_conv1x1_kernel,
        out_shape=jax.ShapeDtypeStruct((N, Cout, HW), jnp.float32),
        grid_spec=pltpu.PrefetchScalarGridSpec(
            num_scalar_prefetch=0,
            grid=(N, n_co),
            in_specs=[
                # X block index is constant along the Cout axis -> stays resident in VMEM.
                pl.BlockSpec((1, Cin, HW), lambda n, c: (n, 0, 0)),
                pl.BlockSpec((1, 1, Cin), lambda n, c: (n, 0, 0)),
                pl.BlockSpec((co_blk, Cin), lambda n, c: (c, 0)),
            ],
            out_specs=pl.BlockSpec((1, co_blk, HW), lambda n, c: (n, c, 0)),
        ),
        compiler_params=pltpu.CompilerParams(
            dimension_semantics=("parallel", "parallel")),
    )(x, s, w)

    # (N, Cout, HW) -> (N, Cout, H, W): pure reshape, no transpose.
    return out.reshape(N, Cout, H, W)


if __name__ == "__main__":
    key = jax.random.PRNGKey(0)
    k_x, k_s, k_w = jax.random.split(key, 3)

    # Shapes implied by the module's forward.
    N, Cin, H, W = 1, 1344, 14, 14
    Cout = 224

    x431 = jax.random.normal(k_x, (N, Cin, H, W), dtype=jnp.float32)
    x436 = jax.random.normal(k_s, (N, Cin, 1, 1), dtype=jnp.float32)
    weight = (jax.random.normal(k_w, (Cout, Cin, 1, 1), dtype=jnp.float32)
              * (2.0 / Cin) ** 0.5)

    fn = jax.jit(mul_conv2d_1x1)
    out = jax.block_until_ready(fn(x431, x436, weight))
    assert out.shape == (N, Cout, H, W)
    assert out.dtype == jnp.float32

    # Reference 1: numerics-matched (same bf16 casts, f32 accumulation).
    w2d = weight.reshape(Cout, Cin)
    w_bf = w2d.astype(jnp.bfloat16).astype(jnp.float32)
    ws = (w_bf[None] * x436.reshape(N, 1, Cin)).astype(jnp.bfloat16)   # (N, Cout, Cin)
    xb = x431.reshape(N, Cin, H * W).astype(jnp.bfloat16)
    ref_bf16 = jnp.einsum("noc,nck->nok", ws, xb,
                          preferred_element_type=jnp.float32).reshape(N, Cout, H, W)
    assert jnp.allclose(out, ref_bf16, atol=2e-3, rtol=2e-3)

    # Reference 2: full-precision module semantics (looser tol for bf16 operands).
    ref_f32 = jnp.einsum("nchw,oc->nohw", x431 * x436, w2d)
    assert jnp.allclose(out, ref_f32, atol=5e-2, rtol=5e-2)

    print("KERNEL_OK")
</pallas_src>

<mosaic_0001>
module attributes {stable_mosaic.version = 11 : i64} {
  func.func @_mul_conv1x1_kernel(%arg0: i32, %arg1: i32, %arg2: memref<1x1344x196xbf16, #tpu.memory_space<vmem>>, %arg3: memref<1x1x1344xf32, #tpu.memory_space<vmem>>, %arg4: memref<112x1344xbf16, #tpu.memory_space<vmem>>, %arg5: memref<1x112x196xf32, #tpu.memory_space<vmem>>) attributes {dimension_semantics = [#tpu.dimension_semantics<parallel>, #tpu.dimension_semantics<parallel>], iteration_bounds = array<i64: 1, 2>, scalar_prefetch = 0 : i64, scratch_operands = 0 : i64, tpu.core_type = #tpu.core_type<tc>, window_params = [{transform_indices = @transform_0, window_bounds = array<i64: 1, 1344, 196>}, {transform_indices = @transform_1, window_bounds = array<i64: 1, 1, 1344>}, {transform_indices = @transform_2, window_bounds = array<i64: 112, 1344>}, {transform_indices = @transform_3, window_bounds = array<i64: 1, 112, 196>}]} {
    %c0 = arith.constant 0 : index
    %c0_0 = arith.constant 0 : index
    %0 = vector.load %arg4[%c0, %c0_0] : memref<112x1344xbf16, #tpu.memory_space<vmem>>, vector<112x1344xbf16>
    %1 = arith.extf %0 : vector<112x1344xbf16> to vector<112x1344xf32>
    %c0_1 = arith.constant 0 : index
    %c0_2 = arith.constant 0 : index
    %c0_3 = arith.constant 0 : index
    %2 = vector.load %arg3[%c0_1, %c0_2, %c0_3] : memref<1x1x1344xf32, #tpu.memory_space<vmem>>, vector<1x1x1344xf32>
    %3 = vector.shape_cast %2 : vector<1x1x1344xf32> to vector<1x1344xf32>
    %4 = vector.broadcast %3 : vector<1x1344xf32> to vector<112x1344xf32>
    %5 = arith.mulf %1, %4 : vector<112x1344xf32>
    %6 = arith.truncf %5 : vector<112x1344xf32> to vector<112x1344xbf16>
    %c0_4 = arith.constant 0 : index
    %c0_5 = arith.constant 0 : index
    %c0_6 = arith.constant 0 : index
    %7 = vector.load %arg2[%c0_4, %c0_5, %c0_6] : memref<1x1344x196xbf16, #tpu.memory_space<vmem>>, vector<1x1344x196xbf16>
    %8 = vector.shape_cast %7 : vector<1x1344x196xbf16> to vector<1344x196xbf16>
    %cst = arith.constant dense<0.000000e+00> : vector<112x196xf32>
    %9 = tpu.matmul %6, %8, %cst {dimension_numbers = #tpu.dot_dimension_numbers<[1], [0], [0], [1], [0, 0, 1, 1], [], []>} : vector<112x1344xbf16>, vector<1344x196xbf16>, vector<112x196xf32> -> vector<112x196xf32>
    %c0_7 = arith.constant 0 : index
    %c0_8 = arith.constant 0 : index
    %c0_9 = arith.constant 0 : index
    %10 = vector.load %arg5[%c0_7, %c0_8, %c0_9] : memref<1x112x196xf32, #tpu.memory_space<vmem>>, vector<1x112x196xf32>
    %11 = vector.shape_cast %10 : vector<1x112x196xf32> to vector<112x196xf32>
    %12 = vector.shape_cast %9 : vector<112x196xf32> to vector<1x112x196xf32>
    tpu.vector_store %arg5[%c0_7, %c0_8, %c0_9], %12 {strides = array<i32>} : memref<1x112x196xf32, #tpu.memory_space<vmem>>, vector<1x112x196xf32>,
    return
  }
  func.func @transform_0(%arg0: i32, %arg1: i32) -> (i32, i32, i32) {
    %c0_i32 = arith.constant 0 : i32
    %c0_i32_0 = arith.constant 0 : i32
    %c0_i32_1 = arith.constant 0 : i32
    return %arg0, %c0_i32, %c0_i32_0 : i32, i32, i32
  }
  func.func @transform_1(%arg0: i32, %arg1: i32) -> (i32, i32, i32) {
    %c0_i32 = arith.constant 0 : i32
    %c0_i32_0 = arith.constant 0 : i32
    %c0_i32_1 = arith.constant 0 : i32
    return %arg0, %c0_i32, %c0_i32_0 : i32, i32, i32
  }
  func.func @transform_2(%arg0: i32, %arg1: i32) -> (i32, i32) {
    %c0_i32 = arith.constant 0 : i32
    %c0_i32_0 = arith.constant 0 : i32
    return %arg1, %c0_i32 : i32, i32
  }
  func.func @transform_3(%arg0: i32, %arg1: i32) -> (i32, i32, i32) {
    %c0_i32 = arith.constant 0 : i32
    %c0_i32_0 = arith.constant 0 : i32
    return %arg0, %arg1, %c0_i32 : i32, i32, i32
  }
}

</mosaic_0001>

<llo_original>
// kernel: mul_conv2d_1x1.1
$region0: #{mul_conv2d_1x1.1}
  #allocation0 [shape = 'u32[]', space=smem, size = 0x4, offset = 0x4, fixed_abs, tag = 'smem constant byte address 0x4 - core index']
  #allocation1 [shape = 'u32[144,128]{1,0:T(1,128)}', space=vmem, size = 0x12000, scoped, tag = 'internal scratch']
  %s0 = inlined_call_operand.vmem [shape: bf16[1,1344,196], index: 0, kind: input, shape index: {}]
  %s1 = inlined_call_operand.vmem [shape: f32[1,1,1344], index: 1, kind: input, shape index: {}]
  %s2 = inlined_call_operand.vmem [shape: bf16[224,1344], index: 2, kind: input, shape index: {}]
  %s3 = inlined_call_operand.vmem [shape: f32[1,224,196], index: 3, kind: output, shape index: {}]
  %s4 = sld [smem:[#allocation0]]
  $region45: #{mul_conv2d_1x1.1} parent=0
    _
  %s6 = ssub.s32 1, %s4
  %s7 = scalar_select 0, %s6, %s4
  loop: start=0, step=1, limit=4
  $region2: #{mul_conv2d_1x1.1} parent=0 // loop_pre_header
    _
  $region3: #{mul_conv2d_1x1.1} parent=0 // loop_header
    %s9 = sphi 0, %s13
    %p10 = scmp.ge.s32.totalorder %s9, 4
    %s16 = sphi 0, %s28
    %s17 = sphi 0, %s24
    %s18 = sphi 0, %s16
    %s19 = sphi 0, %s17
    %s20 = sphi 0, %s18
    %s21 = sphi 0, %s19
    %s31 = sphi 0, %s33
    %s34 = sphi 0, %s31
    %s35 = sphi 0, %s34
    %s51 = sphi 0, %s35
    %s57 = sphi 0, %s59
    %s60 = sphi 0, %s57
    %s61 = sphi 0, %s60
    %s77 = sphi 0, %s61
    %s83 = sphi 0, %s85
    %s86 = sphi 0, %s83
    %s87 = sphi 0, %s86
    %s103 = sphi 0, %s87
    %s111 = sphi 0, %s113
    %s114 = sphi 0, %s111
    %s115 = sphi 0, %s114
    %s131 = sphi 0, %s115
  $region4: #{mul_conv2d_1x1.1} parent=0 // loop_header_branch
    %12 = sbr.rel (%p10) target = $region8
  $region5: #{mul_conv2d_1x1.1} parent=0 // loop_body
    %s14 = ssub.s32 %s9, 1
    %s15 = ssub.s32 %s9, 2
    %s22 = sadd.s32 1, %s17
    %p23 = scmp.ge.s32.totalorder %s22, 2
    %s24 = scalar_select %p23, 0, %s22
    %s25 = sadd.s32 1, %s16
    %s26 = scalar_select %p23, %s25, %s16
    %p27 = scmp.ge.s32.totalorder %s26, 1
    %s28 = scalar_select %p27, 0, %s26
    %s29 = ssub.s32 %s16, %s28
    %p30 = scmp.eq.s32.totalorder %s29, 0
    %s32 = sadd.s32 %s31, 1
    %s33 = scalar_select %p30, %s31, %s32
    %p36 = pneg %p30
    %p37 = scmp.eq.s32.totalorder %s9, 1
    %p38 = por %p36, %p37
    %p39 = scmp.ne.s32.totalorder %s31, %s34
    %p40 = scmp.eq.s32.totalorder %s9, 0
    %p41 = por %p39, %p40
    %p42 = scmp.ne.s32.totalorder %s31, %s34
    %p43 = scmp.eq.s32.totalorder %s14, 1
    %p44 = por %p42, %p43
    %p45 = scmp.ne.s32.totalorder %s34, %s35
    %p46 = scmp.eq.s32.totalorder %s14, 0
    %p47 = por %p45, %p46
    %p48 = scmp.ne.s32.totalorder %s34, %s35
    %p49 = scmp.eq.s32.totalorder %s15, 1
    %p50 = por %p48, %p49
    %p52 = scmp.ne.s32.totalorder %s35, %s51
    %p53 = scmp.eq.s32.totalorder %s15, 0
    %p54 = por %p52, %p53
    %s55 = ssub.s32 %s16, %s28
    %p56 = scmp.eq.s32.totalorder %s55, 0
    %s58 = sadd.s32 %s57, 1
    %s59 = scalar_select %p56, %s57, %s58
    %p62 = pneg %p56
    %p63 = scmp.eq.s32.totalorder %s9, 1
    %p64 = por %p62, %p63
    %p65 = scmp.ne.s32.totalorder %s57, %s60
    %p66 = scmp.eq.s32.totalorder %s9, 0
    %p67 = por %p65, %p66
    %p68 = scmp.ne.s32.totalorder %s57, %s60
    %p69 = scmp.eq.s32.totalorder %s14, 1
    %p70 = por %p68, %p69
    %p71 = scmp.ne.s32.totalorder %s60, %s61
    %p72 = scmp.eq.s32.totalorder %s14, 0
    %p73 = por %p71, %p72
    %p74 = scmp.ne.s32.totalorder %s60, %s61
    %p75 = scmp.eq.s32.totalorder %s15, 1
    %p76 = por %p74, %p75
    %p78 = scmp.ne.s32.totalorder %s61, %s77
    %p79 = scmp.eq.s32.totalorder %s15, 0
    %p80 = por %p78, %p79
    %s81 = ssub.s32 %s17, %s24
    %p82 = scmp.eq.s32.totalorder %s81, 0
    %s84 = sadd.s32 %s83, 1
    %s85 = scalar_select %p82, %s83, %s84
    %p88 = pneg %p82
    %p89 = scmp.eq.s32.totalorder %s9, 1
    %p90 = por %p88, %p89
    %p91 = scmp.ne.s32.totalorder %s83, %s86
    %p92 = scmp.eq.s32.totalorder %s9, 0
    %p93 = por %p91, %p92
    %p94 = scmp.ne.s32.totalorder %s83, %s86
    %p95 = scmp.eq.s32.totalorder %s14, 1
    %p96 = por %p94, %p95
    %p97 = scmp.ne.s32.totalorder %s86, %s87
    %p98 = scmp.eq.s32.totalorder %s14, 0
    %p99 = por %p97, %p98
    %p100 = scmp.ne.s32.totalorder %s86, %s87
    %p101 = scmp.eq.s32.totalorder %s15, 1
    %p102 = por %p100, %p101
    %p104 = scmp.ne.s32.totalorder %s87, %s103
    %p105 = scmp.eq.s32.totalorder %s15, 0
    %p106 = por %p104, %p105
    %s107 = ssub.s32 %s16, %s28
    %s108 = ssub.s32 %s17, %s24
    %s109 = sor.u32 %s107, %s108
    %p110 = scmp.eq.s32.totalorder %s109, 0
    %s112 = sadd.s32 %s111, 1
    %s113 = scalar_select %p110, %s111, %s112
    %p116 = pneg %p110
    %p117 = scmp.eq.s32.totalorder %s9, 1
    %p118 = por %p116, %p117
    %p119 = scmp.ne.s32.totalorder %s111, %s114
    %p120 = scmp.eq.s32.totalorder %s9, 0
    %p121 = por %p119, %p120
    %p122 = scmp.ne.s32.totalorder %s111, %s114
    %p123 = scmp.eq.s32.totalorder %s14, 1
    %p124 = por %p122, %p123
    %p125 = scmp.ne.s32.totalorder %s114, %s115
    %p126 = scmp.eq.s32.totalorder %s14, 0
    %p127 = por %p125, %p126
    %p128 = scmp.ne.s32.totalorder %s114, %s115
    %p129 = scmp.eq.s32.totalorder %s15, 1
    %p130 = por %p128, %p129
    %p132 = scmp.ne.s32.totalorder %s115, %s131
    %p133 = scmp.eq.s32.totalorder %s15, 0
    %p134 = por %p132, %p133
    %p135 = scmp.le.s32.totalorder 1, %s9
    %p136 = scmp.lt.s32.totalorder %s9, 3
    %p137 = pnand %p135, %p136
    %p138 = pneg %p137
    // Predicated region
    $region9: #{mul_conv2d_1x1.1} parent=5 // pred_check
      _
    $region10: #{mul_conv2d_1x1.1} parent=5 // pred_check_branch
      %140 = sbr.rel (%p137) target = $region12
    $region11: #{mul_conv2d_1x1.1} parent=5 // pred_region
      %s141 = ssub.s32 %s9, 1
      // Predicated region
      $region13: #{mul_conv2d_1x1.1} parent=11 // pred_check
        %p142 = pneg %p47
      $region14: #{mul_conv2d_1x1.1} parent=11 // pred_check_branch
        %144 = sbr.rel (%p142) target = $region16
      $region15: #{mul_conv2d_1x1.1} parent=11 // pred_region
        %p145 = scmp.lt.s32.totalorder %s18, 0
        %s146 = scalar_select %p145, %s18, 0
        %s147 = smul.addr %s146, 336
        %s148 = smul.addr %s147, 4
        %s149 = scalar_lea.vmem %s0, %s148
      $region16: #{mul_conv2d_1x1.1} parent=11 // pred_fallthru
        _
      // Predicated region
      $region17: #{mul_conv2d_1x1.1} parent=11 // pred_check
        %p150 = pneg %p73
      $region18: #{mul_conv2d_1x1.1} parent=11 // pred_check_branch
        %152 = sbr.rel (%p150) target = $region20
      $region19: #{mul_conv2d_1x1.1} parent=11 // pred_region
        %p153 = scmp.lt.s32.totalorder %s18, 0
        %s154 = scalar_select %p153, %s18, 0
        %s155 = smul.addr %s154, 11
        %s156 = scalar_lea.vmem %s1, %s155
      $region20: #{mul_conv2d_1x1.1} parent=11 // pred_fallthru
        _
    $region12: #{mul_conv2d_1x1.1} parent=5 // pred_fallthru
      _
    %p157 = scmp.lt.s32.totalorder %s9, 2
    // Predicated region
    $region21: #{mul_conv2d_1x1.1} parent=5 // pred_check
      %p158 = pneg %p157
    $region22: #{mul_conv2d_1x1.1} parent=5 // pred_check_branch
      %160 = sbr.rel (%p158) target = $region24
    $region23: #{mul_conv2d_1x1.1} parent=5 // pred_region
      // Predicated region
      $region25: #{mul_conv2d_1x1.1} parent=23 // pred_check
        %p161 = pneg %p93
      $region26: #{mul_conv2d_1x1.1} parent=23 // pred_check_branch
        %163 = sbr.rel (%p161) target = $region28
      $region27: #{mul_conv2d_1x1.1} parent=23 // pred_region
        %s164 = smul.u32 14, %s17
        %p165 = scmp.lt.s32.totalorder %s164, 27
        %s166 = scalar_select %p165, %s164, 27
        %s167 = smul.addr %s166, 11
        %s168 = smul.addr %s167, 4
        %s169 = scalar_lea.vmem %s2, %s168
        %s170 = smul.u32 14, %s17
      $region28: #{mul_conv2d_1x1.1} parent=23 // pred_fallthru
        _
    $region24: #{mul_conv2d_1x1.1} parent=5 // pred_fallthru
      _
    %p171 = scmp.le.s32.totalorder 1, %s9
    %p172 = scmp.lt.s32.totalorder %s9, 3
    %p173 = pnand %p171, %p172
    %p174 = pneg %p173
    // Predicated region
    $region29: #{mul_conv2d_1x1.1} parent=5 // pred_check
      _
    $region30: #{mul_conv2d_1x1.1} parent=5 // pred_check_branch
      %176 = sbr.rel (%p173) target = $region32
    $region31: #{mul_conv2d_1x1.1} parent=5 // pred_region
      %s177 = ssub.s32 %s9, 1
      %p178 = scmp.lt.s32.totalorder %s18, 0
      %s179 = scalar_select %p178, %s18, 0
      %s180 = smul.addr %s179, 336
      %s181 = smul.addr %s180, 4
      %s182 = scalar_lea.vmem %s0, %s181
      %p183 = pneg %p47
      %p184 = pneg %p44
      %p185 = scmp.lt.s32.totalorder %s18, 0
      %s186 = scalar_select %p185, %s18, 0
      %s187 = smul.addr %s186, 11
      %s188 = scalar_lea.vmem %s1, %s187
      %p189 = pneg %p73
      %p190 = pneg %p70
      %s191 = smul.u32 14, %s19
      %p192 = scmp.lt.s32.totalorder %s191, 27
      %s193 = scalar_select %p192, %s191, 27
      %s194 = smul.addr %s193, 11
      %s195 = smul.addr %s194, 4
      %s196 = scalar_lea.vmem %s2, %s195
      %p197 = pneg %p99
      %p198 = pneg %p96
      %p199 = pneg %p127
      %p200 = pneg %p124
      %s201 = smul.u32 14, %s19
      %p202 = scmp.lt.s32.totalorder %s18, 0
      %s203 = scalar_select %p202, %s18, 0
      %p204 = scmp.lt.s32.totalorder %s201, 27
      %s205 = scalar_select %p204, %s201, 27
      %s206 = smul.addr %s205, 2
      %s207 = smul.addr %s203, 56
      %s208 = sadd.s32 %s206, %s207
      %s209 = smul.addr %s208, 8
      %s210 = scalar_lea.vmem %s3, %s209
      %p211 = scmp.lt.s32.totalorder %s18, 0
      %s212 = scalar_select %p211, %s18, 0
      %s213 = smul.addr %s212, 336
      %s214 = smul.addr %s213, 4
      %s215 = scalar_lea.vmem %s0, %s214
      %p216 = scmp.lt.s32.totalorder %s18, 0
      %s217 = scalar_select %p216, %s18, 0
      %s218 = smul.addr %s217, 11
      %s219 = scalar_lea.vmem %s1, %s218
      %s220 = smul.u32 14, %s19
      %p221 = scmp.lt.s32.totalorder %s220, 27
      %s222 = scalar_select %p221, %s220, 27
      %s223 = smul.addr %s222, 11
      %s224 = smul.addr %s223, 4
      %s225 = scalar_lea.vmem %s2, %s224
      %s226 = smul.u32 14, %s19
      %s227 = smul.u32 14, %s19
      %p228 = scmp.lt.s32.totalorder %s18, 0
      %s229 = scalar_select %p228, %s18, 0
      %p230 = scmp.lt.s32.totalorder %s227, 27
      %s231 = scalar_select %p230, %s227, 27
      %s232 = smul.addr %s231, 2
      %s233 = smul.addr %s229, 56
      %s234 = sadd.s32 %s232, %s233
      %s235 = smul.addr %s234, 8
      %s236 = scalar_lea.vmem %s3, %s235
      %s237 = smul.u32 14, %s19
      %v239 = vld [vmem:[%s225] sm:$0xff]
      %v240 = vld [vmem:[%s225 + $0x8] sm:$0xff]
      %v241 = vld [vmem:[%s225 + $0x10] sm:$0xff]
      %v242 = vld [vmem:[%s225 + $0x18] sm:$0xff]
      %v243 = vld [vmem:[%s225 + $0x20] sm:$0xff]
      %v244 = vld [vmem:[%s225 + $0x28] sm:$0xf]
      %v245 = vld [vmem:[%s225 + $0x2c] sm:$0xff]
      %v246 = vld [vmem:[%s225 + $0x34] sm:$0xff]
      %v247 = vld [vmem:[%s225 + $0x3c] sm:$0xff]
      %v248 = vld [vmem:[%s225 + $0x44] sm:$0xff]
      %v249 = vld [vmem:[%s225 + $0x4c] sm:$0xff]
      %v250 = vld [vmem:[%s225 + $0x54] sm:$0xf]
      %v251 = vld [vmem:[%s225 + $0x58] sm:$0xff]
      %v252 = vld [vmem:[%s225 + $0x60] sm:$0xff]
      %v253 = vld [vmem:[%s225 + $0x68] sm:$0xff]
      %v254 = vld [vmem:[%s225 + $0x70] sm:$0xff]
      %v255 = vld [vmem:[%s225 + $0x78] sm:$0xff]
      %v256 = vld [vmem:[%s225 + $0x80] sm:$0xf]
      %v257 = vld [vmem:[%s225 + $0x84] sm:$0xff]
      %v258 = vld [vmem:[%s225 + $0x8c] sm:$0xff]
      %v259 = vld [vmem:[%s225 + $0x94] sm:$0xff]
      %v260 = vld [vmem:[%s225 + $0x9c] sm:$0xff]
      %v261 = vld [vmem:[%s225 + $0xa4] sm:$0xff]
      %v262 = vld [vmem:[%s225 + $0xac] sm:$0xf]
      %v263 = vld [vmem:[%s225 + $0xb0] sm:$0xff]
      %v264 = vld [vmem:[%s225 + $0xb8] sm:$0xff]
      %v265 = vld [vmem:[%s225 + $0xc0] sm:$0xff]
      %v266 = vld [vmem:[%s225 + $0xc8] sm:$0xff]
      %v267 = vld [vmem:[%s225 + $0xd0] sm:$0xff]
      %v268 = vld [vmem:[%s225 + $0xd8] sm:$0xf]
      %v269 = vld [vmem:[%s225 + $0xdc] sm:$0xff]
      %v270 = vld [vmem:[%s225 + $0xe4] sm:$0xff]
      %v271 = vld [vmem:[%s225 + $0xec] sm:$0xff]
      %v272 = vld [vmem:[%s225 + $0xf4] sm:$0xff]
      %v273 = vld [vmem:[%s225 + $0xfc] sm:$0xff]
      %v274 = vld [vmem:[%s225 + $0x104] sm:$0xf]
      %v275 = vld [vmem:[%s225 + $0x108] sm:$0xff]
      %v276 = vld [vmem:[%s225 + $0x110] sm:$0xff]
      %v277 = vld [vmem:[%s225 + $0x118] sm:$0xff]
      %v278 = vld [vmem:[%s225 + $0x120] sm:$0xff]
      %v279 = vld [vmem:[%s225 + $0x128] sm:$0xff]
      %v280 = vld [vmem:[%s225 + $0x130] sm:$0xf]
      %v281 = vld [vmem:[%s225 + $0x134] sm:$0xff]
      %v282 = vld [vmem:[%s225 + $0x13c] sm:$0xff]
      %v283 = vld [vmem:[%s225 + $0x144] sm:$0xff]
      %v284 = vld [vmem:[%s225 + $0x14c] sm:$0xff]
      %v285 = vld [vmem:[%s225 + $0x154] sm:$0xff]
      %v286 = vld [vmem:[%s225 + $0x15c] sm:$0xf]
      %v287 = vld [vmem:[%s225 + $0x160] sm:$0xff]
      %v288 = vld [vmem:[%s225 + $0x168] sm:$0xff]
      %v289 = vld [vmem:[%s225 + $0x170] sm:$0xff]
      %v290 = vld [vmem:[%s225 + $0x178] sm:$0xff]
      %v291 = vld [vmem:[%s225 + $0x180] sm:$0xff]
      %v292 = vld [vmem:[%s225 + $0x188] sm:$0xf]
      %v293 = vld [vmem:[%s225 + $0x18c] sm:$0xff]
      %v294 = vld [vmem:[%s225 + $0x194] sm:$0xff]
      %v295 = vld [vmem:[%s225 + $0x19c] sm:$0xff]
      %v296 = vld [vmem:[%s225 + $0x1a4] sm:$0xff]
      %v297 = vld [vmem:[%s225 + $0x1ac] sm:$0xff]
      %v298 = vld [vmem:[%s225 + $0x1b4] sm:$0xf]
      %v299 = vld [vmem:[%s225 + $0x1b8] sm:$0xff]
      %v300 = vld [vmem:[%s225 + $0x1c0] sm:$0xff]
      %v301 = vld [vmem:[%s225 + $0x1c8] sm:$0xff]
      %v302 = vld [vmem:[%s225 + $0x1d0] sm:$0xff]
      %v303 = vld [vmem:[%s225 + $0x1d8] sm:$0xff]
      %v304 = vld [vmem:[%s225 + $0x1e0] sm:$0xf]
      %v305 = vld [vmem:[%s225 + $0x1e4] sm:$0xff]
      %v306 = vld [vmem:[%s225 + $0x1ec] sm:$0xff]
      %v307 = vld [vmem:[%s225 + $0x1f4] sm:$0xff]
      %v308 = vld [vmem:[%s225 + $0x1fc] sm:$0xff]
      %v309 = vld [vmem:[%s225 + $0x204] sm:$0xff]
      %v310 = vld [vmem:[%s225 + $0x20c] sm:$0xf]
      %v311 = vld [vmem:[%s225 + $0x210] sm:$0xff]
      %v312 = vld [vmem:[%s225 + $0x218] sm:$0xff]
      %v313 = vld [vmem:[%s225 + $0x220] sm:$0xff]
      %v314 = vld [vmem:[%s225 + $0x228] sm:$0xff]
      %v315 = vld [vmem:[%s225 + $0x230] sm:$0xff]
      %v316 = vld [vmem:[%s225 + $0x238] sm:$0xf]
      %v317 = vld [vmem:[%s225 + $0x23c] sm:$0xff]
      %v318 = vld [vmem:[%s225 + $0x244] sm:$0xff]
      %v319 = vld [vmem:[%s225 + $0x24c] sm:$0xff]
      %v320 = vld [vmem:[%s225 + $0x254] sm:$0xff]
      %v321 = vld [vmem:[%s225 + $0x25c] sm:$0xff]
      %v322 = vld [vmem:[%s225 + $0x264] sm:$0xf]
      %v323 = vunpack.c.l.bf16 %v239
      %v324 = vunpack.c.h.bf16 %v239
      %v325 = vunpack.c.l.bf16 %v240
      %v326 = vunpack.c.h.bf16 %v240
      %v327 = vunpack.c.l.bf16 %v241
      %v328 = vunpack.c.h.bf16 %v241
      %v329 = vunpack.c.l.bf16 %v242
      %v330 = vunpack.c.h.bf16 %v242
      %v331 = vunpack.c.l.bf16 %v243
      %v332 = vunpack.c.h.bf16 %v243
      %v333 = vunpack.c.l.bf16 %v244
      %v334 = vunpack.c.l.bf16 %v245
      %v335 = vunpack.c.h.bf16 %v245
      %v336 = vunpack.c.l.bf16 %v246
      %v337 = vunpack.c.h.bf16 %v246
      %v338 = vunpack.c.l.bf16 %v247
      %v339 = vunpack.c.h.bf16 %v247
      %v340 = vunpack.c.l.bf16 %v248
      %v341 = vunpack.c.h.bf16 %v248
      %v342 = vunpack.c.l.bf16 %v249
      %v343 = vunpack.c.h.bf16 %v249
      %v344 = vunpack.c.l.bf16 %v250
      %v345 = vunpack.c.l.bf16 %v251
      %v346 = vunpack.c.h.bf16 %v251
      %v347 = vunpack.c.l.bf16 %v252
      %v348 = vunpack.c.h.bf16 %v252
      %v349 = vunpack.c.l.bf16 %v253
      %v350 = vunpack.c.h.bf16 %v253
      %v351 = vunpack.c.l.bf16 %v254
      %v352 = vunpack.c.h.bf16 %v254
      %v353 = vunpack.c.l.bf16 %v255
      %v354 = vunpack.c.h.bf16 %v255
      %v355 = vunpack.c.l.bf16 %v256
      %v356 = vunpack.c.l.bf16 %v257
      %v357 = vunpack.c.h.bf16 %v257
      %v358 = vunpack.c.l.bf16 %v258
      %v359 = vunpack.c.h.bf16 %v258
      %v360 = vunpack.c.l.bf16 %v259
      %v361 = vunpack.c.h.bf16 %v259
      %v362 = vunpack.c.l.bf16 %v260
      %v363 = vunpack.c.h.bf16 %v260
      %v364 = vunpack.c.l.bf16 %v261
      %v365 = vunpack.c.h.bf16 %v261
      %v366 = vunpack.c.l.bf16 %v262
      %v367 = vunpack.c.l.bf16 %v263
      %v368 = vunpack.c.h.bf16 %v263
      %v369 = vunpack.c.l.bf16 %v264
      %v370 = vunpack.c.h.bf16 %v264
      %v371 = vunpack.c.l.bf16 %v265
      %v372 = vunpack.c.h.bf16 %v265
      %v373 = vunpack.c.l.bf16 %v266
      %v374 = vunpack.c.h.bf16 %v266
      %v375 = vunpack.c.l.bf16 %v267
      %v376 = vunpack.c.h.bf16 %v267
      %v377 = vunpack.c.l.bf16 %v268
      %v378 = vunpack.c.l.bf16 %v269
      %v379 = vunpack.c.h.bf16 %v269
      %v380 = vunpack.c.l.bf16 %v270
      %v381 = vunpack.c.h.bf16 %v270
      %v382 = vunpack.c.l.bf16 %v271
      %v383 = vunpack.c.h.bf16 %v271
      %v384 = vunpack.c.l.bf16 %v272
      %v385 = vunpack.c.h.bf16 %v272
      %v386 = vunpack.c.l.bf16 %v273
      %v387 = vunpack.c.h.bf16 %v273
      %v388 = vunpack.c.l.bf16 %v274
      %v389 = vunpack.c.l.bf16 %v275
      %v390 = vunpack.c.h.bf16 %v275
      %v391 = vunpack.c.l.bf16 %v276
      %v392 = vunpack.c.h.bf16 %v276
      %v393 = vunpack.c.l.bf16 %v277
      %v394 = vunpack.c.h.bf16 %v277
      %v395 = vunpack.c.l.bf16 %v278
      %v396 = vunpack.c.h.bf16 %v278
      %v397 = vunpack.c.l.bf16 %v279
      %v398 = vunpack.c.h.bf16 %v279
      %v399 = vunpack.c.l.bf16 %v280
      %v400 = vunpack.c.l.bf16 %v281
      %v401 = vunpack.c.h.bf16 %v281
      %v402 = vunpack.c.l.bf16 %v282
      %v403 = vunpack.c.h.bf16 %v282
      %v404 = vunpack.c.l.bf16 %v283
      %v405 = vunpack.c.h.bf16 %v283
      %v406 = vunpack.c.l.bf16 %v284
      %v407 = vunpack.c.h.bf16 %v284
      %v408 = vunpack.c.l.bf16 %v285
      %v409 = vunpack.c.h.bf16 %v285
      %v410 = vunpack.c.l.bf16 %v286
      %v411 = vunpack.c.l.bf16 %v287
      %v412 = vunpack.c.h.bf16 %v287
      %v413 = vunpack.c.l.bf16 %v288
      %v414 = vunpack.c.h.bf16 %v288
      %v415 = vunpack.c.l.bf16 %v289
      %v416 = vunpack.c.h.bf16 %v289
      %v417 = vunpack.c.l.bf16 %v290
      %v418 = vunpack.c.h.bf16 %v290
      %v419 = vunpack.c.l.bf16 %v291
      %v420 = vunpack.c.h.bf16 %v291
      %v421 = vunpack.c.l.bf16 %v292
      %v422 = vunpack.c.l.bf16 %v293
      %v423 = vunpack.c.h.bf16 %v293
      %v424 = vunpack.c.l.bf16 %v294
      %v425 = vunpack.c.h.bf16 %v294
      %v426 = vunpack.c.l.bf16 %v295
      %v427 = vunpack.c.h.bf16 %v295
      %v428 = vunpack.c.l.bf16 %v296
      %v429 = vunpack.c.h.bf16 %v296
      %v430 = vunpack.c.l.bf16 %v297
      %v431 = vunpack.c.h.bf16 %v297
      %v432 = vunpack.c.l.bf16 %v298
      %v433 = vunpack.c.l.bf16 %v299
      %v434 = vunpack.c.h.bf16 %v299
      %v435 = vunpack.c.l.bf16 %v300
      %v436 = vunpack.c.h.bf16 %v300
      %v437 = vunpack.c.l.bf16 %v301
      %v438 = vunpack.c.h.bf16 %v301
      %v439 = vunpack.c.l.bf16 %v302
      %v440 = vunpack.c.h.bf16 %v302
      %v441 = vunpack.c.l.bf16 %v303
      %v442 = vunpack.c.h.bf16 %v303
      %v443 = vunpack.c.l.bf16 %v304
      %v444 = vunpack.c.l.bf16 %v305
      %v445 = vunpack.c.h.bf16 %v305
      %v446 = vunpack.c.l.bf16 %v306
      %v447 = vunpack.c.h.bf16 %v306
      %v448 = vunpack.c.l.bf16 %v307
      %v449 = vunpack.c.h.bf16 %v307
      %v450 = vunpack.c.l.bf16 %v308
      %v451 = vunpack.c.h.bf16 %v308
      %v452 = vunpack.c.l.bf16 %v309
      %v453 = vunpack.c.h.bf16 %v309
      %v454 = vunpack.c.l.bf16 %v310
      %v455 = vunpack.c.l.bf16 %v311
      %v456 = vunpack.c.h.bf16 %v311
      %v457 = vunpack.c.l.bf16 %v312
      %v458 = vunpack.c.h.bf16 %v312
      %v459 = vunpack.c.l.bf16 %v313
      %v460 = vunpack.c.h.bf16 %v313
      %v461 = vunpack.c.l.bf16 %v314
      %v462 = vunpack.c.h.bf16 %v314
      %v463 = vunpack.c.l.bf16 %v315
      %v464 = vunpack.c.h.bf16 %v315
      %v465 = vunpack.c.l.bf16 %v316
      %v466 = vunpack.c.l.bf16 %v317
      %v467 = vunpack.c.h.bf16 %v317
      %v468 = vunpack.c.l.bf16 %v318
      %v469 = vunpack.c.h.bf16 %v318
      %v470 = vunpack.c.l.bf16 %v319
      %v471 = vunpack.c.h.bf16 %v319
      %v472 = vunpack.c.l.bf16 %v320
      %v473 = vunpack.c.h.bf16 %v320
      %v474 = vunpack.c.l.bf16 %v321
      %v475 = vunpack.c.h.bf16 %v321
      %v476 = vunpack.c.l.bf16 %v322
      %v477 = vld [vmem:[%s219] sm:$0xff]
      %v478 = vld [vmem:[%s219 + $0x8] sm:$0x7]
      %v481 = vlaneseq
      %v482 = vshrl.u32 %v481, 7
      %v483 = vsub.s32 0, %v482
      %v484 = vrot.slane %v477, %v483
      %v485 = vlaneseq
      %v486 = vshrl.u32 %v485, 7
      %v487 = vsub.s32 1, %v486
      %v488 = vrot.slane %v477, %v487
      %v489 = vlaneseq
      %v490 = vshrl.u32 %v489, 7
      %v491 = vsub.s32 2, %v490
      %v492 = vrot.slane %v477, %v491
      %v493 = vlaneseq
      %v494 = vshrl.u32 %v493, 7
      %v495 = vsub.s32 3, %v494
      %v496 = vrot.slane %v477, %v495
      %v497 = vlaneseq
      %v498 = vshrl.u32 %v497, 7
      %v499 = vsub.s32 4, %v498
      %v500 = vrot.slane %v477, %v499
      %v501 = vlaneseq
      %v502 = vshrl.u32 %v501, 7
      %v503 = vsub.s32 5, %v502
      %v504 = vrot.slane %v477, %v503
      %v505 = vlaneseq
      %v506 = vshrl.u32 %v505, 7
      %v507 = vsub.s32 6, %v506
      %v508 = vrot.slane %v477, %v507
      %v509 = vlaneseq
      %v510 = vshrl.u32 %v509, 7
      %v511 = vsub.s32 7, %v510
      %v512 = vrot.slane %v477, %v511
      %v513 = vlaneseq
      %v514 = vshrl.u32 %v513, 7
      %v515 = vsub.s32 0, %v514
      %v516 = vrot.slane %v478, %v515
      %v517 = vlaneseq
      %v518 = vshrl.u32 %v517, 7
      %v519 = vsub.s32 1, %v518
      %v520 = vrot.slane %v478, %v519
      %v521 = vlaneseq
      %v522 = vshrl.u32 %v521, 7
      %v523 = vsub.s32 2, %v522
      %v524 = vrot.slane %v478, %v523
      %v536 = vmul.f32 %v323, %v484
      %v537 = vmul.f32 %v324, %v488
      %v538 = vmul.f32 %v325, %v492
      %v539 = vmul.f32 %v326, %v496
      %v540 = vmul.f32 %v327, %v500
      %v541 = vmul.f32 %v328, %v504
      %v542 = vmul.f32 %v329, %v508
      %v543 = vmul.f32 %v330, %v512
      %v544 = vmul.f32 %v331, %v516
      %v545 = vmul.f32 %v332, %v520
      %v546 = vmul.f32 %v333, %v524
      %v547 = vmul.f32 %v334, %v484
      %v548 = vmul.f32 %v335, %v488
      %v549 = vmul.f32 %v336, %v492
      %v550 = vmul.f32 %v337, %v496
      %v551 = vmul.f32 %v338, %v500
      %v552 = vmul.f32 %v339, %v504
      %v553 = vmul.f32 %v340, %v508
      %v554 = vmul.f32 %v341, %v512
      %v555 = vmul.f32 %v342, %v516
      %v556 = vmul.f32 %v343, %v520
      %v557 = vmul.f32 %v344, %v524
      %v558 = vmul.f32 %v345, %v484
      %v559 = vmul.f32 %v346, %v488
      %v560 = vmul.f32 %v347, %v492
      %v561 = vmul.f32 %v348, %v496
      %v562 = vmul.f32 %v349, %v500
      %v563 = vmul.f32 %v350, %v504
      %v564 = vmul.f32 %v351, %v508
      %v565 = vmul.f32 %v352, %v512
      %v566 = vmul.f32 %v353, %v516
      %v567 = vmul.f32 %v354, %v520
      %v568 = vmul.f32 %v355, %v524
      %v569 = vmul.f32 %v356, %v484
      %v570 = vmul.f32 %v357, %v488
      %v571 = vmul.f32 %v358, %v492
      %v572 = vmul.f32 %v359, %v496
      %v573 = vmul.f32 %v360, %v500
      %v574 = vmul.f32 %v361, %v504
      %v575 = vmul.f32 %v362, %v508
      %v576 = vmul.f32 %v363, %v512
      %v577 = vmul.f32 %v364, %v516
      %v578 = vmul.f32 %v365, %v520
      %v579 = vmul.f32 %v366, %v524
      %v580 = vmul.f32 %v367, %v484
      %v581 = vmul.f32 %v368, %v488
      %v582 = vmul.f32 %v369, %v492
      %v583 = vmul.f32 %v370, %v496
      %v584 = vmul.f32 %v371, %v500
      %v585 = vmul.f32 %v372, %v504
      %v586 = vmul.f32 %v373, %v508
      %v587 = vmul.f32 %v374, %v512
      %v588 = vmul.f32 %v375, %v516
      %v589 = vmul.f32 %v376, %v520
      %v590 = vmul.f32 %v377, %v524
      %v591 = vmul.f32 %v378, %v484
      %v592 = vmul.f32 %v379, %v488
      %v593 = vmul.f32 %v380, %v492
      %v594 = vmul.f32 %v381, %v496
      %v595 = vmul.f32 %v382, %v500
      %v596 = vmul.f32 %v383, %v504
      %v597 = vmul.f32 %v384, %v508
      %v598 = vmul.f32 %v385, %v512
      %v599 = vmul.f32 %v386, %v516
      %v600 = vmul.f32 %v387, %v520
      %v601 = vmul.f32 %v388, %v524
      %v602 = vmul.f32 %v389, %v484
      %v603 = vmul.f32 %v390, %v488
      %v604 = vmul.f32 %v391, %v492
      %v605 = vmul.f32 %v392, %v496
      %v606 = vmul.f32 %v393, %v500
      %v607 = vmul.f32 %v394, %v504
      %v608 = vmul.f32 %v395, %v508
      %v609 = vmul.f32 %v396, %v512
      %v610 = vmul.f32 %v397, %v516
      %v611 = vmul.f32 %v398, %v520
      %v612 = vmul.f32 %v399, %v524
      %v613 = vmul.f32 %v400, %v484
      %v614 = vmul.f32 %v401, %v488
      %v615 = vmul.f32 %v402, %v492
      %v616 = vmul.f32 %v403, %v496
      %v617 = vmul.f32 %v404, %v500
      %v618 = vmul.f32 %v405, %v504
      %v619 = vmul.f32 %v406, %v508
      %v620 = vmul.f32 %v407, %v512
      %v621 = vmul.f32 %v408, %v516
      %v622 = vmul.f32 %v409, %v520
      %v623 = vmul.f32 %v410, %v524
      %v624 = vmul.f32 %v411, %v484
      %v625 = vmul.f32 %v412, %v488
      %v626 = vmul.f32 %v413, %v492
      %v627 = vmul.f32 %v414, %v496
      %v628 = vmul.f32 %v415, %v500
      %v629 = vmul.f32 %v416, %v504
      %v630 = vmul.f32 %v417, %v508
      %v631 = vmul.f32 %v418, %v512
      %v632 = vmul.f32 %v419, %v516
      %v633 = vmul.f32 %v420, %v520
      %v634 = vmul.f32 %v421, %v524
      %v635 = vmul.f32 %v422, %v484
      %v636 = vmul.f32 %v423, %v488
      %v637 = vmul.f32 %v424, %v492
      %v638 = vmul.f32 %v425, %v496
      %v639 = vmul.f32 %v426, %v500
      %v640 = vmul.f32 %v427, %v504
      %v641 = vmul.f32 %v428, %v508
      %v642 = vmul.f32 %v429, %v512
      %v643 = vmul.f32 %v430, %v516
      %v644 = vmul.f32 %v431, %v520
      %v645 = vmul.f32 %v432, %v524
      %v646 = vmul.f32 %v433, %v484
      %v647 = vmul.f32 %v434, %v488
      %v648 = vmul.f32 %v435, %v492
      %v649 = vmul.f32 %v436, %v496
      %v650 = vmul.f32 %v437, %v500
      %v651 = vmul.f32 %v438, %v504
      %v652 = vmul.f32 %v439, %v508
      %v653 = vmul.f32 %v440, %v512
      %v654 = vmul.f32 %v441, %v516
      %v655 = vmul.f32 %v442, %v520
      %v656 = vmul.f32 %v443, %v524
      %v657 = vmul.f32 %v444, %v484
      %v658 = vmul.f32 %v445, %v488
      %v659 = vmul.f32 %v446, %v492
      %v660 = vmul.f32 %v447, %v496
      %v661 = vmul.f32 %v448, %v500
      %v662 = vmul.f32 %v449, %v504
      %v663 = vmul.f32 %v450, %v508
      %v664 = vmul.f32 %v451, %v512
      %v665 = vmul.f32 %v452, %v516
      %v666 = vmul.f32 %v453, %v520
      %v667 = vmul.f32 %v454, %v524
      %v668 = vmul.f32 %v455, %v484
      %v669 = vmul.f32 %v456, %v488
      %v670 = vmul.f32 %v457, %v492
      %v671 = vmul.f32 %v458, %v496
      %v672 = vmul.f32 %v459, %v500
      %v673 = vmul.f32 %v460, %v504
      %v674 = vmul.f32 %v461, %v508
      %v675 = vmul.f32 %v462, %v512
      %v676 = vmul.f32 %v463, %v516
      %v677 = vmul.f32 %v464, %v520
      %v678 = vmul.f32 %v465, %v524
      %v679 = vmul.f32 %v466, %v484
      %v680 = vmul.f32 %v467, %v488
      %v681 = vmul.f32 %v468, %v492
      %v682 = vmul.f32 %v469, %v496
      %v683 = vmul.f32 %v470, %v500
      %v684 = vmul.f32 %v471, %v504
      %v685 = vmul.f32 %v472, %v508
      %v686 = vmul.f32 %v473, %v512
      %v687 = vmul.f32 %v474, %v516
      %v688 = vmul.f32 %v475, %v520
      %v689 = vmul.f32 %v476, %v524
      %v690 = vpack.c.bf16 %v547, %v536
      %v691 = vpack.c.bf16 %v548, %v537
      %v692 = vpack.c.bf16 %v549, %v538
      %v693 = vpack.c.bf16 %v550, %v539
      %v694 = vpack.c.bf16 %v551, %v540
      %v695 = vpack.c.bf16 %v552, %v541
      %v696 = vpack.c.bf16 %v553, %v542
      %v697 = vpack.c.bf16 %v554, %v543
      %v698 = vpack.c.bf16 %v555, %v544
      %v699 = vpack.c.bf16 %v556, %v545
      %v700 = vpack.c.bf16 %v557, %v546
      %v701 = vpack.c.bf16 %v569, %v558
      %v702 = vpack.c.bf16 %v570, %v559
      %v703 = vpack.c.bf16 %v571, %v560
      %v704 = vpack.c.bf16 %v572, %v561
      %v705 = vpack.c.bf16 %v573, %v562
      %v706 = vpack.c.bf16 %v574, %v563
      %v707 = vpack.c.bf16 %v575, %v564
      %v708 = vpack.c.bf16 %v576, %v565
      %v709 = vpack.c.bf16 %v577, %v566
      %v710 = vpack.c.bf16 %v578, %v567
      %v711 = vpack.c.bf16 %v579, %v568
      %v712 = vpack.c.bf16 %v591, %v580
      %v713 = vpack.c.bf16 %v592, %v581
      %v714 = vpack.c.bf16 %v593, %v582
      %v715 = vpack.c.bf16 %v594, %v583
      %v716 = vpack.c.bf16 %v595, %v584
      %v717 = vpack.c.bf16 %v596, %v585
      %v718 = vpack.c.bf16 %v597, %v586
      %v719 = vpack.c.bf16 %v598, %v587
      %v720 = vpack.c.bf16 %v599, %v588
      %v721 = vpack.c.bf16 %v600, %v589
      %v722 = vpack.c.bf16 %v601, %v590
      %v723 = vpack.c.bf16 %v613, %v602
      %v724 = vpack.c.bf16 %v614, %v603
      %v725 = vpack.c.bf16 %v615, %v604
      %v726 = vpack.c.bf16 %v616, %v605
      %v727 = vpack.c.bf16 %v617, %v606
      %v728 = vpack.c.bf16 %v618, %v607
      %v729 = vpack.c.bf16 %v619, %v608
      %v730 = vpack.c.bf16 %v620, %v609
      %v731 = vpack.c.bf16 %v621, %v610
      %v732 = vpack.c.bf16 %v622, %v611
      %v733 = vpack.c.bf16 %v623, %v612
      %v734 = vpack.c.bf16 %v635, %v624
      %v735 = vpack.c.bf16 %v636, %v625
      %v736 = vpack.c.bf16 %v637, %v626
      %v737 = vpack.c.bf16 %v638, %v627
      %v738 = vpack.c.bf16 %v639, %v628
      %v739 = vpack.c.bf16 %v640, %v629
      %v740 = vpack.c.bf16 %v641, %v630
      %v741 = vpack.c.bf16 %v642, %v631
      %v742 = vpack.c.bf16 %v643, %v632
      %v743 = vpack.c.bf16 %v644, %v633
      %v744 = vpack.c.bf16 %v645, %v634
      %v745 = vpack.c.bf16 %v657, %v646
      %v746 = vpack.c.bf16 %v658, %v647
      %v747 = vpack.c.bf16 %v659, %v648
      %v748 = vpack.c.bf16 %v660, %v649
      %v749 = vpack.c.bf16 %v661, %v650
      %v750 = vpack.c.bf16 %v662, %v651
      %v751 = vpack.c.bf16 %v663, %v652
      %v752 = vpack.c.bf16 %v664, %v653
      %v753 = vpack.c.bf16 %v665, %v654
      %v754 = vpack.c.bf16 %v666, %v655
      %v755 = vpack.c.bf16 %v667, %v656
      %v756 = vpack.c.bf16 %v679, %v668
      %v757 = vpack.c.bf16 %v680, %v669
      %v758 = vpack.c.bf16 %v681, %v670
      %v759 = vpack.c.bf16 %v682, %v671
      %v760 = vpack.c.bf16 %v683, %v672
      %v761 = vpack.c.bf16 %v684, %v673
      %v762 = vpack.c.bf16 %v685, %v674
      %v763 = vpack.c.bf16 %v686, %v675
      %v764 = vpack.c.bf16 %v687, %v676
      %v765 = vpack.c.bf16 %v688, %v677
      %v766 = vpack.c.bf16 %v689, %v678
      %v767 = vld [vmem:[%s215] sm:$0xff]
      %v768 = vld [vmem:[%s215 + $0x8] sm:$0xff]
      %v769 = vld [vmem:[%s215 + $0x10] sm:$0xff]
      %v770 = vld [vmem:[%s215 + $0x18] sm:$0xff]
      %v771 = vld [vmem:[%s215 + $0x20] sm:$0xff]
      %v772 = vld [vmem:[%s215 + $0x28] sm:$0xff]
      %v773 = vld [vmem:[%s215 + $0x30] sm:$0xff]
      %v774 = vld [vmem:[%s215 + $0x38] sm:$0xff]
      %v775 = vld [vmem:[%s215 + $0x40] sm:$0xff]
      %v776 = vld [vmem:[%s215 + $0x48] sm:$0xff]
      %v777 = vld [vmem:[%s215 + $0x50] sm:$0xff]
      %v778 = vld [vmem:[%s215 + $0x58] sm:$0xff]
      %v779 = vld [vmem:[%s215 + $0x60] sm:$0xff]
      %v780 = vld [vmem:[%s215 + $0x68] sm:$0xff]
      %v781 = vld [vmem:[%s215 + $0x70] sm:$0xff]
      %v782 = vld [vmem:[%s215 + $0x78] sm:$0xff]
      %v783 = vld [vmem:[%s215 + $0x80] sm:$0xff]
      %v784 = vld [vmem:[%s215 + $0x88] sm:$0xff]
      %v785 = vld [vmem:[%s215 + $0x90] sm:$0xff]
      %v786 = vld [vmem:[%s215 + $0x98] sm:$0xff]
      %v787 = vld [vmem:[%s215 + $0xa0] sm:$0xff]
      %v788 = vld [vmem:[%s215 + $0xa8] sm:$0xff]
      %v789 = vld [vmem:[%s215 + $0xb0] sm:$0xff]
      %v790 = vld [vmem:[%s215 + $0xb8] sm:$0xff]
      %v791 = vld [vmem:[%s215 + $0xc0] sm:$0xff]
      %v792 = vld [vmem:[%s215 + $0xc8] sm:$0xff]
      %v793 = vld [vmem:[%s215 + $0xd0] sm:$0xff]
      %v794 = vld [vmem:[%s215 + $0xd8] sm:$0xff]
      %v795 = vld [vmem:[%s215 + $0xe0] sm:$0xff]
      %v796 = vld [vmem:[%s215 + $0xe8] sm:$0xff]
      %v797 = vld [vmem:[%s215 + $0xf0] sm:$0xff]
      %v798 = vld [vmem:[%s215 + $0xf8] sm:$0xff]
      %v799 = vld [vmem:[%s215 + $0x100] sm:$0xff]
      %v800 = vld [vmem:[%s215 + $0x108] sm:$0xff]
      %v801 = vld [vmem:[%s215 + $0x110] sm:$0xff]
      %v802 = vld [vmem:[%s215 + $0x118] sm:$0xff]
      %v803 = vld [vmem:[%s215 + $0x120] sm:$0xff]
      %v804 = vld [vmem:[%s215 + $0x128] sm:$0xff]
      %v805 = vld [vmem:[%s215 + $0x130] sm:$0xff]
      %v806 = vld [vmem:[%s215 + $0x138] sm:$0xff]
      %v807 = vld [vmem:[%s215 + $0x140] sm:$0xff]
      %v808 = vld [vmem:[%s215 + $0x148] sm:$0xff]
      %v809 = vld [vmem:[%s215 + $0x150] sm:$0xff]
      %v810 = vld [vmem:[%s215 + $0x158] sm:$0xff]
      %v811 = vld [vmem:[%s215 + $0x160] sm:$0xff]
      %v812 = vld [vmem:[%s215 + $0x168] sm:$0xff]
      %v813 = vld [vmem:[%s215 + $0x170] sm:$0xff]
      %v814 = vld [vmem:[%s215 + $0x178] sm:$0xff]
      %v815 = vld [vmem:[%s215 + $0x180] sm:$0xff]
      %v816 = vld [vmem:[%s215 + $0x188] sm:$0xff]
      %v817 = vld [vmem:[%s215 + $0x190] sm:$0xff]
      %v818 = vld [vmem:[%s215 + $0x198] sm:$0xff]
      %v819 = vld [vmem:[%s215 + $0x1a0] sm:$0xff]
      %v820 = vld [vmem:[%s215 + $0x1a8] sm:$0xff]
      %v821 = vld [vmem:[%s215 + $0x1b0] sm:$0xff]
      %v822 = vld [vmem:[%s215 + $0x1b8] sm:$0xff]
      %v823 = vld [vmem:[%s215 + $0x1c0] sm:$0xff]
      %v824 = vld [vmem:[%s215 + $0x1c8] sm:$0xff]
      %v825 = vld [vmem:[%s215 + $0x1d0] sm:$0xff]
      %v826 = vld [vmem:[%s215 + $0x1d8] sm:$0xff]
      %v827 = vld [vmem:[%s215 + $0x1e0] sm:$0xff]
      %v828 = vld [vmem:[%s215 + $0x1e8] sm:$0xff]
      %v829 = vld [vmem:[%s215 + $0x1f0] sm:$0xff]
      %v830 = vld [vmem:[%s215 + $0x1f8] sm:$0xff]
      %v831 = vld [vmem:[%s215 + $0x200] sm:$0xff]
      %v832 = vld [vmem:[%s215 + $0x208] sm:$0xff]
      %v833 = vld [vmem:[%s215 + $0x210] sm:$0xff]
      %v834 = vld [vmem:[%s215 + $0x218] sm:$0xff]
      %v835 = vld [vmem:[%s215 + $0x220] sm:$0xff]
      %v836 = vld [vmem:[%s215 + $0x228] sm:$0xff]
      %v837 = vld [vmem:[%s215 + $0x230] sm:$0xff]
      %v838 = vld [vmem:[%s215 + $0x238] sm:$0xff]
      %v839 = vld [vmem:[%s215 + $0x240] sm:$0xff]
      %v840 = vld [vmem:[%s215 + $0x248] sm:$0xff]
      %v841 = vld [vmem:[%s215 + $0x250] sm:$0xff]
      %v842 = vld [vmem:[%s215 + $0x258] sm:$0xff]
      %v843 = vld [vmem:[%s215 + $0x260] sm:$0xff]
      %v844 = vld [vmem:[%s215 + $0x268] sm:$0xff]
      %v845 = vld [vmem:[%s215 + $0x270] sm:$0xff]
      %v846 = vld [vmem:[%s215 + $0x278] sm:$0xff]
      %v847 = vld [vmem:[%s215 + $0x280] sm:$0xff]
      %v848 = vld [vmem:[%s215 + $0x288] sm:$0xff]
      %v849 = vld [vmem:[%s215 + $0x290] sm:$0xff]
      %v850 = vld [vmem:[%s215 + $0x298] sm:$0xff]
      %v851 = vld [vmem:[%s215 + $0x2a0] sm:$0xff]
      %v852 = vld [vmem:[%s215 + $0x2a8] sm:$0xff]
      %v853 = vld [vmem:[%s215 + $0x2b0] sm:$0xff]
      %v854 = vld [vmem:[%s215 + $0x2b8] sm:$0xff]
      %v855 = vld [vmem:[%s215 + $0x2c0] sm:$0xff]
      %v856 = vld [vmem:[%s215 + $0x2c8] sm:$0xff]
      %v857 = vld [vmem:[%s215 + $0x2d0] sm:$0xff]
      %v858 = vld [vmem:[%s215 + $0x2d8] sm:$0xff]
      %v859 = vld [vmem:[%s215 + $0x2e0] sm:$0xff]
      %v860 = vld [vmem:[%s215 + $0x2e8] sm:$0xff]
      %v861 = vld [vmem:[%s215 + $0x2f0] sm:$0xff]
      %v862 = vld [vmem:[%s215 + $0x2f8] sm:$0xff]
      %v863 = vld [vmem:[%s215 + $0x300] sm:$0xff]
      %v864 = vld [vmem:[%s215 + $0x308] sm:$0xff]
      %v865 = vld [vmem:[%s215 + $0x310] sm:$0xff]
      %v866 = vld [vmem:[%s215 + $0x318] sm:$0xff]
      %v867 = vld [vmem:[%s215 + $0x320] sm:$0xff]
      %v868 = vld [vmem:[%s215 + $0x328] sm:$0xff]
      %v869 = vld [vmem:[%s215 + $0x330] sm:$0xff]
      %v870 = vld [vmem:[%s215 + $0x338] sm:$0xff]
      %v871 = vld [vmem:[%s215 + $0x340] sm:$0xff]
      %v872 = vld [vmem:[%s215 + $0x348] sm:$0xff]
      %v873 = vld [vmem:[%s215 + $0x350] sm:$0xff]
      %v874 = vld [vmem:[%s215 + $0x358] sm:$0xff]
      %v875 = vld [vmem:[%s215 + $0x360] sm:$0xff]
      %v876 = vld [vmem:[%s215 + $0x368] sm:$0xff]
      %v877 = vld [vmem:[%s215 + $0x370] sm:$0xff]
      %v878 = vld [vmem:[%s215 + $0x378] sm:$0xff]
      %v879 = vld [vmem:[%s215 + $0x380] sm:$0xff]
      %v880 = vld [vmem:[%s215 + $0x388] sm:$0xff]
      %v881 = vld [vmem:[%s215 + $0x390] sm:$0xff]
      %v882 = vld [vmem:[%s215 + $0x398] sm:$0xff]
      %v883 = vld [vmem:[%s215 + $0x3a0] sm:$0xff]
      %v884 = vld [vmem:[%s215 + $0x3a8] sm:$0xff]
      %v885 = vld [vmem:[%s215 + $0x3b0] sm:$0xff]
      %v886 = vld [vmem:[%s215 + $0x3b8] sm:$0xff]
      %v887 = vld [vmem:[%s215 + $0x3c0] sm:$0xff]
      %v888 = vld [vmem:[%s215 + $0x3c8] sm:$0xff]
      %v889 = vld [vmem:[%s215 + $0x3d0] sm:$0xff]
      %v890 = vld [vmem:[%s215 + $0x3d8] sm:$0xff]
      %v891 = vld [vmem:[%s215 + $0x3e0] sm:$0xff]
      %v892 = vld [vmem:[%s215 + $0x3e8] sm:$0xff]
      %v893 = vld [vmem:[%s215 + $0x3f0] sm:$0xff]
      %v894 = vld [vmem:[%s215 + $0x3f8] sm:$0xff]
      %v895 = vld [vmem:[%s215 + $0x400] sm:$0xff]
      %v896 = vld [vmem:[%s215 + $0x408] sm:$0xff]
      %v897 = vld [vmem:[%s215 + $0x410] sm:$0xff]
      %v898 = vld [vmem:[%s215 + $0x418] sm:$0xff]
      %v899 = vld [vmem:[%s215 + $0x420] sm:$0xff]
      %v900 = vld [vmem:[%s215 + $0x428] sm:$0xff]
      %v901 = vld [vmem:[%s215 + $0x430] sm:$0xff]
      %v902 = vld [vmem:[%s215 + $0x438] sm:$0xff]
      %v903 = vld [vmem:[%s215 + $0x440] sm:$0xff]
      %v904 = vld [vmem:[%s215 + $0x448] sm:$0xff]
      %v905 = vld [vmem:[%s215 + $0x450] sm:$0xff]
      %v906 = vld [vmem:[%s215 + $0x458] sm:$0xff]
      %v907 = vld [vmem:[%s215 + $0x460] sm:$0xff]
      %v908 = vld [vmem:[%s215 + $0x468] sm:$0xff]
      %v909 = vld [vmem:[%s215 + $0x470] sm:$0xff]
      %v910 = vld [vmem:[%s215 + $0x478] sm:$0xff]
      %v911 = vld [vmem:[%s215 + $0x480] sm:$0xff]
      %v912 = vld [vmem:[%s215 + $0x488] sm:$0xff]
      %v913 = vld [vmem:[%s215 + $0x490] sm:$0xff]
      %v914 = vld [vmem:[%s215 + $0x498] sm:$0xff]
      %v915 = vld [vmem:[%s215 + $0x4a0] sm:$0xff]
      %v916 = vld [vmem:[%s215 + $0x4a8] sm:$0xff]
      %v917 = vld [vmem:[%s215 + $0x4b0] sm:$0xff]
      %v918 = vld [vmem:[%s215 + $0x4b8] sm:$0xff]
      %v919 = vld [vmem:[%s215 + $0x4c0] sm:$0xff]
      %v920 = vld [vmem:[%s215 + $0x4c8] sm:$0xff]
      %v921 = vld [vmem:[%s215 + $0x4d0] sm:$0xff]
      %v922 = vld [vmem:[%s215 + $0x4d8] sm:$0xff]
      %v923 = vld [vmem:[%s215 + $0x4e0] sm:$0xff]
      %v924 = vld [vmem:[%s215 + $0x4e8] sm:$0xff]
      %v925 = vld [vmem:[%s215 + $0x4f0] sm:$0xff]
      %v926 = vld [vmem:[%s215 + $0x4f8] sm:$0xff]
      %v927 = vld [vmem:[%s215 + $0x500] sm:$0xff]
      %v928 = vld [vmem:[%s215 + $0x508] sm:$0xff]
      %v929 = vld [vmem:[%s215 + $0x510] sm:$0xff]
      %v930 = vld [vmem:[%s215 + $0x518] sm:$0xff]
      %v931 = vld [vmem:[%s215 + $0x520] sm:$0xff]
      %v932 = vld [vmem:[%s215 + $0x528] sm:$0xff]
      %v933 = vld [vmem:[%s215 + $0x530] sm:$0xff]
      %v934 = vld [vmem:[%s215 + $0x538] sm:$0xff]
      %v1103 = vunpack.c.l.b16 %v767
      %v1104 = vunpack.c.h.b16 %v767
      %v1105 = vunpack.c.l.b16 %v768
      %v1106 = vunpack.c.h.b16 %v768
      %v1107 = vunpack.c.l.b16 %v769
      %v1108 = vunpack.c.h.b16 %v769
      %v1109 = vunpack.c.l.b16 %v770
      %v1110 = vunpack.c.h.b16 %v770
      %v1111 = vunpack.c.l.b16 %v771
      %v1112 = vunpack.c.h.b16 %v771
      %v1113 = vunpack.c.l.b16 %v772
      %v1114 = vunpack.c.h.b16 %v772
      %v1115 = vunpack.c.l.b16 %v773
      %v1116 = vunpack.c.h.b16 %v773
      %v1117 = vunpack.c.l.b16 %v774
      %v1118 = vunpack.c.h.b16 %v774
      %v1119 = vunpack.c.l.b16 %v775
      %v1120 = vunpack.c.h.b16 %v775
      %v1121 = vunpack.c.l.b16 %v776
      %v1122 = vunpack.c.h.b16 %v776
      %v1123 = vunpack.c.l.b16 %v777
      %v1124 = vunpack.c.h.b16 %v777
      %v1125 = vunpack.c.l.b16 %v778
      %v1126 = vunpack.c.h.b16 %v778
      %v1127 = vunpack.c.l.b16 %v779
      %v1128 = vunpack.c.h.b16 %v779
      %v1129 = vunpack.c.l.b16 %v780
      %v1130 = vunpack.c.h.b16 %v780
      %v1131 = vunpack.c.l.b16 %v781
      %v1132 = vunpack.c.h.b16 %v781
      %v1133 = vunpack.c.l.b16 %v782
      %v1134 = vunpack.c.h.b16 %v782
      %v1135 = vunpack.c.l.b16 %v783
      %v1136 = vunpack.c.h.b16 %v783
      %v1137 = vunpack.c.l.b16 %v784
      %v1138 = vunpack.c.h.b16 %v784
      %v1139 = vunpack.c.l.b16 %v785
      %v1140 = vunpack.c.h.b16 %v785
      %v1141 = vunpack.c.l.b16 %v786
      %v1142 = vunpack.c.h.b16 %v786
      %v1143 = vunpack.c.l.b16 %v787
      %v1144 = vunpack.c.h.b16 %v787
      %v1145 = vunpack.c.l.b16 %v788
      %v1146 = vunpack.c.h.b16 %v788
      %v1147 = vunpack.c.l.b16 %v789
      %v1148 = vunpack.c.h.b16 %v789
      %v1149 = vunpack.c.l.b16 %v790
      %v1150 = vunpack.c.h.b16 %v790
      %v1151 = vunpack.c.l.b16 %v791
      %v1152 = vunpack.c.h.b16 %v791
      %v1153 = vunpack.c.l.b16 %v792
      %v1154 = vunpack.c.h.b16 %v792
      %v1155 = vunpack.c.l.b16 %v793
      %v1156 = vunpack.c.h.b16 %v793
      %v1157 = vunpack.c.l.b16 %v794
      %v1158 = vunpack.c.h.b16 %v794
      %v1159 = vunpack.c.l.b16 %v795
      %v1160 = vunpack.c.h.b16 %v795
      %v1161 = vunpack.c.l.b16 %v796
      %v1162 = vunpack.c.h.b16 %v796
      %v1163 = vunpack.c.l.b16 %v797
      %v1164 = vunpack.c.h.b16 %v797
      %v1165 = vunpack.c.l.b16 %v798
      %v1166 = vunpack.c.h.b16 %v798
      %v1167 = vunpack.c.l.b16 %v799
      %v1168 = vunpack.c.h.b16 %v799
      %v1169 = vunpack.c.l.b16 %v800
      %v1170 = vunpack.c.h.b16 %v800
      %v1171 = vunpack.c.l.b16 %v801
      %v1172 = vunpack.c.h.b16 %v801
      %v1173 = vunpack.c.l.b16 %v802
      %v1174 = vunpack.c.h.b16 %v802
      %v1175 = vunpack.c.l.b16 %v803
      %v1176 = vunpack.c.h.b16 %v803
      %v1177 = vunpack.c.l.b16 %v804
      %v1178 = vunpack.c.h.b16 %v804
      %v1179 = vunpack.c.l.b16 %v805
      %v1180 = vunpack.c.h.b16 %v805
      %v1181 = vunpack.c.l.b16 %v806
      %v1182 = vunpack.c.h.b16 %v806
      %v1183 = vunpack.c.l.b16 %v807
      %v1184 = vunpack.c.h.b16 %v807
      %v1185 = vunpack.c.l.b16 %v808
      %v1186 = vunpack.c.h.b16 %v808
      %v1187 = vunpack.c.l.b16 %v809
      %v1188 = vunpack.c.h.b16 %v809
      %v1189 = vunpack.c.l.b16 %v810
      %v1190 = vunpack.c.h.b16 %v810
      %v1191 = vunpack.c.l.b16 %v811
      %v1192 = vunpack.c.h.b16 %v811
      %v1193 = vunpack.c.l.b16 %v812
      %v1194 = vunpack.c.h.b16 %v812
      %v1195 = vunpack.c.l.b16 %v813
      %v1196 = vunpack.c.h.b16 %v813
      %v1197 = vunpack.c.l.b16 %v814
      %v1198 = vunpack.c.h.b16 %v814
      %v1199 = vunpack.c.l.b16 %v815
      %v1200 = vunpack.c.h.b16 %v815
      %v1201 = vunpack.c.l.b16 %v816
      %v1202 = vunpack.c.h.b16 %v816
      %v1203 = vunpack.c.l.b16 %v817
      %v1204 = vunpack.c.h.b16 %v817
      %v1205 = vunpack.c.l.b16 %v818
      %v1206 = vunpack.c.h.b16 %v818
      %v1207 = vunpack.c.l.b16 %v819
      %v1208 = vunpack.c.h.b16 %v819
      %v1209 = vunpack.c.l.b16 %v820
      %v1210 = vunpack.c.h.b16 %v820
      %v1211 = vunpack.c.l.b16 %v821
      %v1212 = vunpack.c.h.b16 %v821
      %v1213 = vunpack.c.l.b16 %v822
      %v1214 = vunpack.c.h.b16 %v822
      %v1215 = vunpack.c.l.b16 %v823
      %v1216 = vunpack.c.h.b16 %v823
      %v1217 = vunpack.c.l.b16 %v824
      %v1218 = vunpack.c.h.b16 %v824
      %v1219 = vunpack.c.l.b16 %v825
      %v1220 = vunpack.c.h.b16 %v825
      %v1221 = vunpack.c.l.b16 %v826
      %v1222 = vunpack.c.h.b16 %v826
      %v1223 = vunpack.c.l.b16 %v827
      %v1224 = vunpack.c.h.b16 %v827
      %v1225 = vunpack.c.l.b16 %v828
      %v1226 = vunpack.c.h.b16 %v828
      %v1227 = vunpack.c.l.b16 %v829
      %v1228 = vunpack.c.h.b16 %v829
      %v1229 = vunpack.c.l.b16 %v830
      %v1230 = vunpack.c.h.b16 %v830
      %v1231 = vunpack.c.l.b16 %v831
      %v1232 = vunpack.c.h.b16 %v831
      %v1233 = vunpack.c.l.b16 %v832
      %v1234 = vunpack.c.h.b16 %v832
      %v1235 = vunpack.c.l.b16 %v833
      %v1236 = vunpack.c.h.b16 %v833
      %v1237 = vunpack.c.l.b16 %v834
      %v1238 = vunpack.c.h.b16 %v834
      %v1239 = vunpack.c.l.b16 %v835
      %v1240 = vunpack.c.h.b16 %v835
      %v1241 = vunpack.c.l.b16 %v836
      %v1242 = vunpack.c.h.b16 %v836
      %v1243 = vunpack.c.l.b16 %v837
      %v1244 = vunpack.c.h.b16 %v837
      %v1245 = vunpack.c.l.b16 %v838
      %v1246 = vunpack.c.h.b16 %v838
      %v1247 = vunpack.c.l.b16 %v839
      %v1248 = vunpack.c.h.b16 %v839
      %v1249 = vunpack.c.l.b16 %v840
      %v1250 = vunpack.c.h.b16 %v840
      %v1251 = vunpack.c.l.b16 %v841
      %v1252 = vunpack.c.h.b16 %v841
      %v1253 = vunpack.c.l.b16 %v842
      %v1254 = vunpack.c.h.b16 %v842
      %v1255 = vunpack.c.l.b16 %v843
      %v1256 = vunpack.c.h.b16 %v843
      %v1257 = vunpack.c.l.b16 %v844
      %v1258 = vunpack.c.h.b16 %v844
      %v1259 = vunpack.c.l.b16 %v845
      %v1260 = vunpack.c.h.b16 %v845
      %v1261 = vunpack.c.l.b16 %v846
      %v1262 = vunpack.c.h.b16 %v846
      %v1263 = vunpack.c.l.b16 %v847
      %v1264 = vunpack.c.h.b16 %v847
      %v1265 = vunpack.c.l.b16 %v848
      %v1266 = vunpack.c.h.b16 %v848
      %v1267 = vunpack.c.l.b16 %v849
      %v1268 = vunpack.c.h.b16 %v849
      %v1269 = vunpack.c.l.b16 %v850
      %v1270 = vunpack.c.h.b16 %v850
      %v1271 = vunpack.c.l.b16 %v851
      %v1272 = vunpack.c.h.b16 %v851
      %v1273 = vunpack.c.l.b16 %v852
      %v1274 = vunpack.c.h.b16 %v852
      %v1275 = vunpack.c.l.b16 %v853
      %v1276 = vunpack.c.h.b16 %v853
      %v1277 = vunpack.c.l.b16 %v854
      %v1278 = vunpack.c.h.b16 %v854
      %v1279 = vunpack.c.l.b16 %v855
      %v1280 = vunpack.c.h.b16 %v855
      %v1281 = vunpack.c.l.b16 %v856
      %v1282 = vunpack.c.h.b16 %v856
      %v1283 = vunpack.c.l.b16 %v857
      %v1284 = vunpack.c.h.b16 %v857
      %v1285 = vunpack.c.l.b16 %v858
      %v1286 = vunpack.c.h.b16 %v858
      %v1287 = vunpack.c.l.b16 %v859
      %v1288 = vunpack.c.h.b16 %v859
      %v1289 = vunpack.c.l.b16 %v860
      %v1290 = vunpack.c.h.b16 %v860
      %v1291 = vunpack.c.l.b16 %v861
      %v1292 = vunpack.c.h.b16 %v861
      %v1293 = vunpack.c.l.b16 %v862
      %v1294 = vunpack.c.h.b16 %v862
      %v1295 = vunpack.c.l.b16 %v863
      %v1296 = vunpack.c.h.b16 %v863
      %v1297 = vunpack.c.l.b16 %v864
      %v1298 = vunpack.c.h.b16 %v864
      %v1299 = vunpack.c.l.b16 %v865
      %v1300 = vunpack.c.h.b16 %v865
      %v1301 = vunpack.c.l.b16 %v866
      %v1302 = vunpack.c.h.b16 %v866
      %v1303 = vunpack.c.l.b16 %v867
      %v1304 = vunpack.c.h.b16 %v867
      %v1305 = vunpack.c.l.b16 %v868
      %v1306 = vunpack.c.h.b16 %v868
      %v1307 = vunpack.c.l.b16 %v869
      %v1308 = vunpack.c.h.b16 %v869
      %v1309 = vunpack.c.l.b16 %v870
      %v1310 = vunpack.c.h.b16 %v870
      %v1311 = vunpack.c.l.b16 %v871
      %v1312 = vunpack.c.h.b16 %v871
      %v1313 = vunpack.c.l.b16 %v872
      %v1314 = vunpack.c.h.b16 %v872
      %v1315 = vunpack.c.l.b16 %v873
      %v1316 = vunpack.c.h.b16 %v873
      %v1317 = vunpack.c.l.b16 %v874
      %v1318 = vunpack.c.h.b16 %v874
      %v1319 = vunpack.c.l.b16 %v875
      %v1320 = vunpack.c.h.b16 %v875
      %v1321 = vunpack.c.l.b16 %v876
      %v1322 = vunpack.c.h.b16 %v876
      %v1323 = vunpack.c.l.b16 %v877
      %v1324 = vunpack.c.h.b16 %v877
      %v1325 = vunpack.c.l.b16 %v878
      %v1326 = vunpack.c.h.b16 %v878
      %v1327 = vunpack.c.l.b16 %v879
      %v1328 = vunpack.c.h.b16 %v879
      %v1329 = vunpack.c.l.b16 %v880
      %v1330 = vunpack.c.h.b16 %v880
      %v1331 = vunpack.c.l.b16 %v881
      %v1332 = vunpack.c.h.b16 %v881
      %v1333 = vunpack.c.l.b16 %v882
      %v1334 = vunpack.c.h.b16 %v882
      %v1335 = vunpack.c.l.b16 %v883
      %v1336 = vunpack.c.h.b16 %v883
      %v1337 = vunpack.c.l.b16 %v884
      %v1338 = vunpack.c.h.b16 %v884
      %v1339 = vunpack.c.l.b16 %v885
      %v1340 = vunpack.c.h.b16 %v885
      %v1341 = vunpack.c.l.b16 %v886
      %v1342 = vunpack.c.h.b16 %v886
      %v1343 = vunpack.c.l.b16 %v887
      %v1344 = vunpack.c.h.b16 %v887
      %v1345 = vunpack.c.l.b16 %v888
      %v1346 = vunpack.c.h.b16 %v888
      %v1347 = vunpack.c.l.b16 %v889
      %v1348 = vunpack.c.h.b16 %v889
      %v1349 = vunpack.c.l.b16 %v890
      %v1350 = vunpack.c.h.b16 %v890
      %v1351 = vunpack.c.l.b16 %v891
      %v1352 = vunpack.c.h.b16 %v891
      %v1353 = vunpack.c.l.b16 %v892
      %v1354 = vunpack.c.h.b16 %v892
      %v1355 = vunpack.c.l.b16 %v893
      %v1356 = vunpack.c.h.b16 %v893
      %v1357 = vunpack.c.l.b16 %v894
      %v1358 = vunpack.c.h.b16 %v894
      %v1359 = vunpack.c.l.b16 %v895
      %v1360 = vunpack.c.h.b16 %v895
      %v1361 = vunpack.c.l.b16 %v896
      %v1362 = vunpack.c.h.b16 %v896
      %v1363 = vunpack.c.l.b16 %v897
      %v1364 = vunpack.c.h.b16 %v897
      %v1365 = vunpack.c.l.b16 %v898
      %v1366 = vunpack.c.h.b16 %v898
      %v1367 = vunpack.c.l.b16 %v899
      %v1368 = vunpack.c.h.b16 %v899
      %v1369 = vunpack.c.l.b16 %v900
      %v1370 = vunpack.c.h.b16 %v900
      %v1371 = vunpack.c.l.b16 %v901
      %v1372 = vunpack.c.h.b16 %v901
      %v1373 = vunpack.c.l.b16 %v902
      %v1374 = vunpack.c.h.b16 %v902
      %v1375 = vunpack.c.l.b16 %v903
      %v1376 = vunpack.c.h.b16 %v903
      %v1377 = vunpack.c.l.b16 %v904
      %v1378 = vunpack.c.h.b16 %v904
      %v1379 = vunpack.c.l.b16 %v905
      %v1380 = vunpack.c.h.b16 %v905
      %v1381 = vunpack.c.l.b16 %v906
      %v1382 = vunpack.c.h.b16 %v906
      %v1383 = vunpack.c.l.b16 %v907
      %v1384 = vunpack.c.h.b16 %v907
      %v1385 = vunpack.c.l.b16 %v908
      %v1386 = vunpack.c.h.b16 %v908
      %v1387 = vunpack.c.l.b16 %v909
      %v1388 = vunpack.c.h.b16 %v909
      %v1389 = vunpack.c.l.b16 %v910
      %v1390 = vunpack.c.h.b16 %v910
      %v1391 = vunpack.c.l.b16 %v911
      %v1392 = vunpack.c.h.b16 %v911
      %v1393 = vunpack.c.l.b16 %v912
      %v1394 = vunpack.c.h.b16 %v912
      %v1395 = vunpack.c.l.b16 %v913
      %v1396 = vunpack.c.h.b16 %v913
      %v1397 = vunpack.c.l.b16 %v914
      %v1398 = vunpack.c.h.b16 %v914
      %v1399 = vunpack.c.l.b16 %v915
      %v1400 = vunpack.c.h.b16 %v915
      %v1401 = vunpack.c.l.b16 %v916
      %v1402 = vunpack.c.h.b16 %v916
      %v1403 = vunpack.c.l.b16 %v917
      %v1404 = vunpack.c.h.b16 %v917
      %v1405 = vunpack.c.l.b16 %v918
      %v1406 = vunpack.c.h.b16 %v918
      %v1407 = vunpack.c.l.b16 %v919
      %v1408 = vunpack.c.h.b16 %v919
      %v1409 = vunpack.c.l.b16 %v920
      %v1410 = vunpack.c.h.b16 %v920
      %v1411 = vunpack.c.l.b16 %v921
      %v1412 = vunpack.c.h.b16 %v921
      %v1413 = vunpack.c.l.b16 %v922
      %v1414 = vunpack.c.h.b16 %v922
      %v1415 = vunpack.c.l.b16 %v923
      %v1416 = vunpack.c.h.b16 %v923
      %v1417 = vunpack.c.l.b16 %v924
      %v1418 = vunpack.c.h.b16 %v924
      %v1419 = vunpack.c.l.b16 %v925
      %v1420 = vunpack.c.h.b16 %v925
      %v1421 = vunpack.c.l.b16 %v926
      %v1422 = vunpack.c.h.b16 %v926
      %v1423 = vunpack.c.l.b16 %v927
      %v1424 = vunpack.c.h.b16 %v927
      %v1425 = vunpack.c.l.b16 %v928
      %v1426 = vunpack.c.h.b16 %v928
      %v1427 = vunpack.c.l.b16 %v929
      %v1428 = vunpack.c.h.b16 %v929
      %v1429 = vunpack.c.l.b16 %v930
      %v1430 = vunpack.c.h.b16 %v930
      %v1431 = vunpack.c.l.b16 %v931
      %v1432 = vunpack.c.h.b16 %v931
      %v1433 = vunpack.c.l.b16 %v932
      %v1434 = vunpack.c.h.b16 %v932
      %v1435 = vunpack.c.l.b16 %v933
      %v1436 = vunpack.c.h.b16 %v933
      %v1437 = vunpack.c.l.b16 %v934
      %v1438 = vunpack.c.h.b16 %v934
      %v1439 = vpack.c.b16 %v1105, %v1103
      %v1440 = vpack.c.b16 %v1106, %v1104
      %v1441 = vpack.c.b16 %v1109, %v1107
      %v1442 = vpack.c.b16 %v1110, %v1108
      %v1443 = vpack.c.b16 %v1113, %v1111
      %v1444 = vpack.c.b16 %v1114, %v1112
      %v1445 = vpack.c.b16 %v1117, %v1115
      %v1446 = vpack.c.b16 %v1118, %v1116
      %v1447 = vpack.c.b16 %v1121, %v1119
      %v1448 = vpack.c.b16 %v1122, %v1120
      %v1449 = vpack.c.b16 %v1125, %v1123
      %v1450 = vpack.c.b16 %v1126, %v1124
      %v1451 = vpack.c.b16 %v1129, %v1127
      %v1452 = vpack.c.b16 %v1130, %v1128
      %v1453 = vpack.c.b16 %v1133, %v1131
      %v1454 = vpack.c.b16 %v1134, %v1132
      %v1455 = vpack.c.b16 %v1137, %v1135
      %v1456 = vpack.c.b16 %v1138, %v1136
      %v1457 = vpack.c.b16 %v1141, %v1139
      %v1458 = vpack.c.b16 %v1142, %v1140
      %v1459 = vpack.c.b16 %v1145, %v1143
      %v1460 = vpack.c.b16 %v1146, %v1144
      %v1461 = vpack.c.b16 %v1149, %v1147
      %v1462 = vpack.c.b16 %v1150, %v1148
      %v1463 = vpack.c.b16 %v1153, %v1151
      %v1464 = vpack.c.b16 %v1154, %v1152
      %v1465 = vpack.c.b16 %v1157, %v1155
      %v1466 = vpack.c.b16 %v1158, %v1156
      %v1467 = vpack.c.b16 %v1161, %v1159
      %v1468 = vpack.c.b16 %v1162, %v1160
      %v1469 = vpack.c.b16 %v1165, %v1163
      %v1470 = vpack.c.b16 %v1166, %v1164
      %v1471 = vpack.c.b16 %v1169, %v1167
      %v1472 = vpack.c.b16 %v1170, %v1168
      %v1473 = vpack.c.b16 %v1173, %v1171
      %v1474 = vpack.c.b16 %v1174, %v1172
      %v1475 = vpack.c.b16 %v1177, %v1175
      %v1476 = vpack.c.b16 %v1178, %v1176
      %v1477 = vpack.c.b16 %v1181, %v1179
      %v1478 = vpack.c.b16 %v1182, %v1180
      %v1479 = vpack.c.b16 %v1185, %v1183
      %v1480 = vpack.c.b16 %v1186, %v1184
      %v1481 = vpack.c.b16 %v1189, %v1187
      %v1482 = vpack.c.b16 %v1190, %v1188
      %v1483 = vpack.c.b16 %v1193, %v1191
      %v1484 = vpack.c.b16 %v1194, %v1192
      %v1485 = vpack.c.b16 %v1197, %v1195
      %v1486 = vpack.c.b16 %v1198, %v1196
      %v1487 = vpack.c.b16 %v1201, %v1199
      %v1488 = vpack.c.b16 %v1202, %v1200
      %v1489 = vpack.c.b16 %v1205, %v1203
      %v1490 = vpack.c.b16 %v1206, %v1204
      %v1491 = vpack.c.b16 %v1209, %v1207
      %v1492 = vpack.c.b16 %v1210, %v1208
      %v1493 = vpack.c.b16 %v1213, %v1211
      %v1494 = vpack.c.b16 %v1214, %v1212
      %v1495 = vpack.c.b16 %v1217, %v1215
      %v1496 = vpack.c.b16 %v1218, %v1216
      %v1497 = vpack.c.b16 %v1221, %v1219
      %v1498 = vpack.c.b16 %v1222, %v1220
      %v1499 = vpack.c.b16 %v1225, %v1223
      %v1500 = vpack.c.b16 %v1226, %v1224
      %v1501 = vpack.c.b16 %v1229, %v1227
      %v1502 = vpack.c.b16 %v1230, %v1228
      %v1503 = vpack.c.b16 %v1233, %v1231
      %v1504 = vpack.c.b16 %v1234, %v1232
      %v1505 = vpack.c.b16 %v1237, %v1235
      %v1506 = vpack.c.b16 %v1238, %v1236
      %v1507 = vpack.c.b16 %v1241, %v1239
      %v1508 = vpack.c.b16 %v1242, %v1240
      %v1509 = vpack.c.b16 %v1245, %v1243
      %v1510 = vpack.c.b16 %v1246, %v1244
      %v1511 = vpack.c.b16 %v1249, %v1247
      %v1512 = vpack.c.b16 %v1250, %v1248
      %v1513 = vpack.c.b16 %v1253, %v1251
      %v1514 = vpack.c.b16 %v1254, %v1252
      %v1515 = vpack.c.b16 %v1257, %v1255
      %v1516 = vpack.c.b16 %v1258, %v1256
      %v1517 = vpack.c.b16 %v1261, %v1259
      %v1518 = vpack.c.b16 %v1262, %v1260
      %v1519 = vpack.c.b16 %v1265, %v1263
      %v1520 = vpack.c.b16 %v1266, %v1264
      %v1521 = vpack.c.b16 %v1269, %v1267
      %v1522 = vpack.c.b16 %v1270, %v1268
      %v1523 = vpack.c.b16 %v1273, %v1271
      %v1524 = vpack.c.b16 %v1274, %v1272
      %v1525 = vpack.c.b16 %v1277, %v1275
      %v1526 = vpack.c.b16 %v1278, %v1276
      %v1527 = vpack.c.b16 %v1281, %v1279
      %v1528 = vpack.c.b16 %v1282, %v1280
      %v1529 = vpack.c.b16 %v1285, %v1283
      %v1530 = vpack.c.b16 %v1286, %v1284
      %v1531 = vpack.c.b16 %v1289, %v1287
      %v1532 = vpack.c.b16 %v1290, %v1288
      %v1533 = vpack.c.b16 %v1293, %v1291
      %v1534 = vpack.c.b16 %v1294, %v1292
      %v1535 = vpack.c.b16 %v1297, %v1295
      %v1536 = vpack.c.b16 %v1298, %v1296
      %v1537 = vpack.c.b16 %v1301, %v1299
      %v1538 = vpack.c.b16 %v1302, %v1300
      %v1539 = vpack.c.b16 %v1305, %v1303
      %v1540 = vpack.c.b16 %v1306, %v1304
      %v1541 = vpack.c.b16 %v1309, %v1307
      %v1542 = vpack.c.b16 %v1310, %v1308
      %v1543 = vpack.c.b16 %v1313, %v1311
      %v1544 = vpack.c.b16 %v1314, %v1312
      %v1545 = vpack.c.b16 %v1317, %v1315
      %v1546 = vpack.c.b16 %v1318, %v1316
      %v1547 = vpack.c.b16 %v1321, %v1319
      %v1548 = vpack.c.b16 %v1322, %v1320
      %v1549 = vpack.c.b16 %v1325, %v1323
      %v1550 = vpack.c.b16 %v1326, %v1324
      %v1551 = vpack.c.b16 %v1329, %v1327
      %v1552 = vpack.c.b16 %v1330, %v1328
      %v1553 = vpack.c.b16 %v1333, %v1331
      %v1554 = vpack.c.b16 %v1334, %v1332
      %v1555 = vpack.c.b16 %v1337, %v1335
      %v1556 = vpack.c.b16 %v1338, %v1336
      %v1557 = vpack.c.b16 %v1341, %v1339
      %v1558 = vpack.c.b16 %v1342, %v1340
      %v1559 = vpack.c.b16 %v1345, %v1343
      %v1560 = vpack.c.b16 %v1346, %v1344
      %v1561 = vpack.c.b16 %v1349, %v1347
      %v1562 = vpack.c.b16 %v1350, %v1348
      %v1563 = vpack.c.b16 %v1353, %v1351
      %v1564 = vpack.c.b16 %v1354, %v1352
      %v1565 = vpack.c.b16 %v1357, %v1355
      %v1566 = vpack.c.b16 %v1358, %v1356
      %v1567 = vpack.c.b16 %v1361, %v1359
      %v1568 = vpack.c.b16 %v1362, %v1360
      %v1569 = vpack.c.b16 %v1365, %v1363
      %v1570 = vpack.c.b16 %v1366, %v1364
      %v1571 = vpack.c.b16 %v1369, %v1367
      %v1572 = vpack.c.b16 %v1370, %v1368
      %v1573 = vpack.c.b16 %v1373, %v1371
      %v1574 = vpack.c.b16 %v1374, %v1372
      %v1575 = vpack.c.b16 %v1377, %v1375
      %v1576 = vpack.c.b16 %v1378, %v1376
      %v1577 = vpack.c.b16 %v1381, %v1379
      %v1578 = vpack.c.b16 %v1382, %v1380
      %v1579 = vpack.c.b16 %v1385, %v1383
      %v1580 = vpack.c.b16 %v1386, %v1384
      %v1581 = vpack.c.b16 %v1389, %v1387
      %v1582 = vpack.c.b16 %v1390, %v1388
      %v1583 = vpack.c.b16 %v1393, %v1391
      %v1584 = vpack.c.b16 %v1394, %v1392
      %v1585 = vpack.c.b16 %v1397, %v1395
      %v1586 = vpack.c.b16 %v1398, %v1396
      %v1587 = vpack.c.b16 %v1401, %v1399
      %v1588 = vpack.c.b16 %v1402, %v1400
      %v1589 = vpack.c.b16 %v1405, %v1403
      %v1590 = vpack.c.b16 %v1406, %v1404
      %v1591 = vpack.c.b16 %v1409, %v1407
      %v1592 = vpack.c.b16 %v1410, %v1408
      %v1593 = vpack.c.b16 %v1413, %v1411
      %v1594 = vpack.c.b16 %v1414, %v1412
      %v1595 = vpack.c.b16 %v1417, %v1415
      %v1596 = vpack.c.b16 %v1418, %v1416
      %v1597 = vpack.c.b16 %v1421, %v1419
      %v1598 = vpack.c.b16 %v1422, %v1420
      %v1599 = vpack.c.b16 %v1425, %v1423
      %v1600 = vpack.c.b16 %v1426, %v1424
      %v1601 = vpack.c.b16 %v1429, %v1427
      %v1602 = vpack.c.b16 %v1430, %v1428
      %v1603 = vpack.c.b16 %v1433, %v1431
      %v1604 = vpack.c.b16 %v1434, %v1432
      %v1605 = vpack.c.b16 %v1437, %v1435
      %v1606 = vpack.c.b16 %v1438, %v1436
      %vm1775 = vcmask 523264
      %v1777 = vsel %vm1775, %v700, 0
      %v1780 = vsel %vm1775, %v711, 0
      %v1783 = vsel %vm1775, %v722, 0
      %v1786 = vsel %vm1775, %v733, 0
      %v1789 = vsel %vm1775, %v744, 0
      %v1792 = vsel %vm1775, %v755, 0
      %v1795 = vsel %vm1775, %v766, 0
      %1797 = vmatprep.subr.bf16.mxu0 %v1440
      %1798 = vmatpush1.bf16.msra.mxu0 %v1439
      %1799 = vmatprep.subr.bf16.mxu0 %v1442
      %1800 = vmatpush1.bf16.msra.mxu0 %v1441
      %1801 = vmatprep.subr.bf16.mxu0 %v1444
      %1802 = vmatpush1.bf16.msra.mxu0 %v1443
      %1803 = vmatprep.subr.bf16.mxu0 %v1446
      %1804 = vmatpush1.bf16.msra.mxu0 %v1445
      %1805 = vmatprep.subr.bf16.mxu0 %v1448
      %1806 = vmatpush1.bf16.msra.mxu0 %v1447
      %1807 = vmatprep.subr.bf16.mxu0 %v1450
      %1808 = vmatpush1.bf16.msra.mxu0 %v1449
      %1809 = vmatprep.subr.bf16.mxu0 %v1452
      %1810 = vmatpush1.bf16.msra.mxu0 %v1451
      %1811 = vmatprep.subr.bf16.mxu0 %v1454
      %1812 = vmatpush1.bf16.msra.mxu0 %v1453
      %1813 = vmatprep.subr.bf16.mxu0 %v1456
      %1814 = vmatpush1.bf16.msra.mxu0 %v1455
      %1815 = vmatprep.subr.bf16.mxu0 %v1458
      %1816 = vmatpush1.bf16.msra.mxu0 %v1457
      %1817 = vmatprep.subr.bf16.mxu0 %v1460
      %1818 = vmatpush1.bf16.msra.mxu0 %v1459
      %1819 = vmatprep.subr.bf16.mxu0 %v1462
      %1820 = vmatpush1.bf16.msra.mxu0 %v1461
      %1821 = vmatprep.subr.bf16.mxu0 %v1464
      %1822 = vmatpush1.bf16.msra.mxu0 %v1463
      %1823 = vmatprep.subr.bf16.mxu0 %v1466
      %1824 = vmatpush1.bf16.msra.mxu0 %v1465
      %1825 = vmatprep.subr.bf16.mxu0 %v1468
      %1826 = vmatpush1.bf16.msra.mxu0 %v1467
      %1827 = vmatprep.subr.bf16.mxu0 %v1470
      %1828 = vmatpush1.bf16.msra.mxu0 %v1469
      %1829 = vmatprep.mubr.bf16.mxu0 %v691
      %1830 = vmatmul.mubr.bf16.gmra.mrb[0].mxu0 %v690
      %v1831 = vpop.f32.mrb[0].mxu0
      %v1832 = vadd.f32 0.0, %v1831
      %v1833 = vpop.f32.mrb[0].mxu0
      %v1834 = vadd.f32 0.0, %v1833
      %v1835 = vpop.f32.mrb[0].mxu0
      %v1836 = vadd.f32 0.0, %v1835
      %v1837 = vpop.f32.mrb[0].mxu0
      %v1838 = vadd.f32 0.0, %v1837
      %1839 = vmatprep.mubr.bf16.mxu0 %v702
      %1840 = vmatmul.mubr.bf16.gmra.mrb[0].mxu0 %v701
      %v1841 = vpop.f32.mrb[0].mxu0
      %v1842 = vadd.f32 0.0, %v1841
      %v1843 = vpop.f32.mrb[0].mxu0
      %v1844 = vadd.f32 0.0, %v1843
      %v1845 = vpop.f32.mrb[0].mxu0
      %v1846 = vadd.f32 0.0, %v1845
      %v1847 = vpop.f32.mrb[0].mxu0
      %v1848 = vadd.f32 0.0, %v1847
      %1849 = vmatprep.mubr.bf16.mxu0 %v713
      %1850 = vmatmul.mubr.bf16.gmra.mrb[0].mxu0 %v712
      %v1851 = vpop.f32.mrb[0].mxu0
      %v1852 = vadd.f32 0.0, %v1851
      %v1853 = vpop.f32.mrb[0].mxu0
      %v1854 = vadd.f32 0.0, %v1853
      %v1855 = vpop.f32.mrb[0].mxu0
      %v1856 = vadd.f32 0.0, %v1855
      %v1857 = vpop.f32.mrb[0].mxu0
      %v1858 = vadd.f32 0.0, %v1857
      %1859 = vmatprep.mubr.bf16.mxu0 %v724
      %1860 = vmatmul.mubr.bf16.gmra.mrb[0].mxu0 %v723
      %v1861 = vpop.f32.mrb[0].mxu0
      %v1862 = vadd.f32 0.0, %v1861
      %v1863 = vpop.f32.mrb[0].mxu0
      %v1864 = vadd.f32 0.0, %v1863
      %v1865 = vpop.f32.mrb[0].mxu0
      %v1866 = vadd.f32 0.0, %v1865
      %v1867 = vpop.f32.mrb[0].mxu0
      %v1868 = vadd.f32 0.0, %v1867
      %1869 = vmatprep.mubr.bf16.mxu0 %v735
      %1870 = vmatmul.mubr.bf16.gmra.mrb[0].mxu0 %v734
      %v1871 = vpop.f32.mrb[0].mxu0
      %v1872 = vadd.f32 0.0, %v1871
      %v1873 = vpop.f32.mrb[0].mxu0
      %v1874 = vadd.f32 0.0, %v1873
      %v1875 = vpop.f32.mrb[0].mxu0
      %v1876 = vadd.f32 0.0, %v1875
      %v1877 = vpop.f32.mrb[0].mxu0
      %v1878 = vadd.f32 0.0, %v1877
      %1879 = vmatprep.mubr.bf16.mxu0 %v746
      %1880 = vmatmul.mubr.bf16.gmra.mrb[0].mxu0 %v745
      %v1881 = vpop.f32.mrb[0].mxu0
      %v1882 = vadd.f32 0.0, %v1881
      %v1883 = vpop.f32.mrb[0].mxu0
      %v1884 = vadd.f32 0.0, %v1883
      %v1885 = vpop.f32.mrb[0].mxu0
      %v1886 = vadd.f32 0.0, %v1885
      %v1887 = vpop.f32.mrb[0].mxu0
      %v1888 = vadd.f32 0.0, %v1887
      %1889 = vmatprep.mubr.bf16.mxu0 %v757
      %1890 = vmatmul.mubr.bf16.gmra.mrb[0].mxu0 %v756
      %v1891 = vpop.f32.mrb[0].mxu0
      %v1892 = vadd.f32 0.0, %v1891
      %v1893 = vpop.f32.mrb[0].mxu0
      %v1894 = vadd.f32 0.0, %v1893
      %v1895 = vpop.f32.mrb[0].mxu0
      %v1896 = vadd.f32 0.0, %v1895
      %v1897 = vpop.f32.mrb[0].mxu0
      %v1898 = vadd.f32 0.0, %v1897
      %1899 = vdwg.mxu0
      %1900 = vmatprep.subr.bf16.mxu0 %v1472
      %1901 = vmatpush1.bf16.msra.mxu0 %v1471
      %1902 = vmatprep.subr.bf16.mxu0 %v1474
      %1903 = vmatpush1.bf16.msra.mxu0 %v1473
      %1904 = vmatprep.subr.bf16.mxu0 %v1476
      %1905 = vmatpush1.bf16.msra.mxu0 %v1475
      %1906 = vmatprep.subr.bf16.mxu0 %v1478
      %1907 = vmatpush1.bf16.msra.mxu0 %v1477
      %1908 = vmatprep.subr.bf16.mxu0 %v1480
      %1909 = vmatpush1.bf16.msra.mxu0 %v1479
      %1910 = vmatprep.subr.bf16.mxu0 %v1482
      %1911 = vmatpush1.bf16.msra.mxu0 %v1481
      %1912 = vmatprep.subr.bf16.mxu0 %v1484
      %1913 = vmatpush1.bf16.msra.mxu0 %v1483
      %1914 = vmatprep.subr.bf16.mxu0 %v1486
      %1915 = vmatpush1.bf16.msra.mxu0 %v1485
      %1916 = vmatprep.subr.bf16.mxu0 %v1488
      %1917 = vmatpush1.bf16.msra.mxu0 %v1487
      %1918 = vmatprep.subr.bf16.mxu0 %v1490
      %1919 = vmatpush1.bf16.msra.mxu0 %v1489
      %1920 = vmatprep.subr.bf16.mxu0 %v1492
      %1921 = vmatpush1.bf16.msra.mxu0 %v1491
      %1922 = vmatprep.subr.bf16.mxu0 %v1494
      %1923 = vmatpush1.bf16.msra.mxu0 %v1493
      %1924 = vmatprep.subr.bf16.mxu0 %v1496
      %1925 = vmatpush1.bf16.msra.mxu0 %v1495
      %1926 = vmatprep.subr.bf16.mxu0 %v1498
      %1927 = vmatpush1.bf16.msra.mxu0 %v1497
      %1928 = vmatprep.subr.bf16.mxu0 %v1500
      %1929 = vmatpush1.bf16.msra.mxu0 %v1499
      %1930 = vmatprep.subr.bf16.mxu0 %v1502
      %1931 = vmatpush1.bf16.msra.mxu0 %v1501
      %1932 = vmatprep.mubr.bf16.mxu0 %v693
      %1933 = vmatmul.mubr.bf16.gmra.mrb[0].mxu0 %v692
      %v1934 = vpop.f32.mrb[0].mxu0
      %v1935 = vadd.f32 %v1832, %v1934
      %v1936 = vpop.f32.mrb[0].mxu0
      %v1937 = vadd.f32 %v1834, %v1936
      %v1938 = vpop.f32.mrb[0].mxu0
      %v1939 = vadd.f32 %v1836, %v1938
      %v1940 = vpop.f32.mrb[0].mxu0
      %v1941 = vadd.f32 %v1838, %v1940
      %1942 = vmatprep.mubr.bf16.mxu0 %v704
      %1943 = vmatmul.mubr.bf16.gmra.mrb[0].mxu0 %v703
      %v1944 = vpop.f32.mrb[0].mxu0
      %v1945 = vadd.f32 %v1842, %v1944
      %v1946 = vpop.f32.mrb[0].mxu0
      %v1947 = vadd.f32 %v1844, %v1946
      %v1948 = vpop.f32.mrb[0].mxu0
      %v1949 = vadd.f32 %v1846, %v1948
      %v1950 = vpop.f32.mrb[0].mxu0
      %v1951 = vadd.f32 %v1848, %v1950
      %1952 = vmatprep.mubr.bf16.mxu0 %v715
      %1953 = vmatmul.mubr.bf16.gmra.mrb[0].mxu0 %v714
      %v1954 = vpop.f32.mrb[0].mxu0
      %v1955 = vadd.f32 %v1852, %v1954
      %v1956 = vpop.f32.mrb[0].mxu0
      %v1957 = vadd.f32 %v1854, %v1956
      %v1958 = vpop.f32.mrb[0].mxu0
      %v1959 = vadd.f32 %v1856, %v1958
      %v1960 = vpop.f32.mrb[0].mxu0
      %v1961 = vadd.f32 %v1858, %v1960
      %1962 = vmatprep.mubr.bf16.mxu0 %v726
      %1963 = vmatmul.mubr.bf16.gmra.mrb[0].mxu0 %v725
      %v1964 = vpop.f32.mrb[0].mxu0
      %v1965 = vadd.f32 %v1862, %v1964
      %v1966 = vpop.f32.mrb[0].mxu0
      %v1967 = vadd.f32 %v1864, %v1966
      %v1968 = vpop.f32.mrb[0].mxu0
      %v1969 = vadd.f32 %v1866, %v1968
      %v1970 = vpop.f32.mrb[0].mxu0
      %v1971 = vadd.f32 %v1868, %v1970
      %1972 = vmatprep.mubr.bf16.mxu0 %v737
      %1973 = vmatmul.mubr.bf16.gmra.mrb[0].mxu0 %v736
      %v1974 = vpop.f32.mrb[0].mxu0
      %v1975 = vadd.f32 %v1872, %v1974
      %v1976 = vpop.f32.mrb[0].mxu0
      %v1977 = vadd.f32 %v1874, %v1976
      %v1978 = vpop.f32.mrb[0].mxu0
      %v1979 = vadd.f32 %v1876, %v1978
      %v1980 = vpop.f32.mrb[0].mxu0
      %v1981 = vadd.f32 %v1878, %v1980
      %1982 = vmatprep.mubr.bf16.mxu0 %v748
      %1983 = vmatmul.mubr.bf16.gmra.mrb[0].mxu0 %v747
      %v1984 = vpop.f32.mrb[0].mxu0
      %v1985 = vadd.f32 %v1882, %v1984
      %v1986 = vpop.f32.mrb[0].mxu0
      %v1987 = vadd.f32 %v1884, %v1986
      %v1988 = vpop.f32.mrb[0].mxu0
      %v1989 = vadd.f32 %v1886, %v1988
      %v1990 = vpop.f32.mrb[0].mxu0
      %v1991 = vadd.f32 %v1888, %v1990
      %1992 = vmatprep.mubr.bf16.mxu0 %v759
      %1993 = vmatmul.mubr.bf16.gmra.mrb[0].mxu0 %v758
      %v1994 = vpop.f32.mrb[0].mxu0
      %v1995 = vadd.f32 %v1892, %v1994
      %v1996 = vpop.f32.mrb[0].mxu0
      %v1997 = vadd.f32 %v1894, %v1996
      %v1998 = vpop.f32.mrb[0].mxu0
      %v1999 = vadd.f32 %v1896, %v1998
      %v2000 = vpop.f32.mrb[0].mxu0
      %v2001 = vadd.f32 %v1898, %v2000
      %2002 = vdwg.mxu0
      %2003 = vmatprep.subr.bf16.mxu0 %v1504
      %2004 = vmatpush1.bf16.msra.mxu0 %v1503
      %2005 = vmatprep.subr.bf16.mxu0 %v1506
      %2006 = vmatpush1.bf16.msra.mxu0 %v1505
      %2007 = vmatprep.subr.bf16.mxu0 %v1508
      %2008 = vmatpush1.bf16.msra.mxu0 %v1507
      %2009 = vmatprep.subr.bf16.mxu0 %v1510
      %2010 = vmatpush1.bf16.msra.mxu0 %v1509
      %2011 = vmatprep.subr.bf16.mxu0 %v1512
      %2012 = vmatpush1.bf16.msra.mxu0 %v1511
      %2013 = vmatprep.subr.bf16.mxu0 %v1514
      %2014 = vmatpush1.bf16.msra.mxu0 %v1513
      %2015 = vmatprep.subr.bf16.mxu0 %v1516
      %2016 = vmatpush1.bf16.msra.mxu0 %v1515
      %2017 = vmatprep.subr.bf16.mxu0 %v1518
      %2018 = vmatpush1.bf16.msra.mxu0 %v1517
      %2019 = vmatprep.subr.bf16.mxu0 %v1520
      %2020 = vmatpush1.bf16.msra.mxu0 %v1519
      %2021 = vmatprep.subr.bf16.mxu0 %v1522
      %2022 = vmatpush1.bf16.msra.mxu0 %v1521
      %2023 = vmatprep.subr.bf16.mxu0 %v1524
      %2024 = vmatpush1.bf16.msra.mxu0 %v1523
      %2025 = vmatprep.subr.bf16.mxu0 %v1526
      %2026 = vmatpush1.bf16.msra.mxu0 %v1525
      %2027 = vmatprep.subr.bf16.mxu0 %v1528
      %2028 = vmatpush1.bf16.msra.mxu0 %v1527
      %2029 = vmatprep.subr.bf16.mxu0 %v1530
      %2030 = vmatpush1.bf16.msra.mxu0 %v1529
      %2031 = vmatprep.subr.bf16.mxu0 %v1532
      %2032 = vmatpush1.bf16.msra.mxu0 %v1531
      %2033 = vmatprep.subr.bf16.mxu0 %v1534
      %2034 = vmatpush1.bf16.msra.mxu0 %v1533
      %2035 = vmatprep.mubr.bf16.mxu0 %v695
      %2036 = vmatmul.mubr.bf16.gmra.mrb[0].mxu0 %v694
      %v2037 = vpop.f32.mrb[0].mxu0
      %v2038 = vadd.f32 %v1935, %v2037
      %v2039 = vpop.f32.mrb[0].mxu0
      %v2040 = vadd.f32 %v1937, %v2039
      %v2041 = vpop.f32.mrb[0].mxu0
      %v2042 = vadd.f32 %v1939, %v2041
      %v2043 = vpop.f32.mrb[0].mxu0
      %v2044 = vadd.f32 %v1941, %v2043
      %2045 = vmatprep.mubr.bf16.mxu0 %v706
      %2046 = vmatmul.mubr.bf16.gmra.mrb[0].mxu0 %v705
      %v2047 = vpop.f32.mrb[0].mxu0
      %v2048 = vadd.f32 %v1945, %v2047
      %v2049 = vpop.f32.mrb[0].mxu0
      %v2050 = vadd.f32 %v1947, %v2049
      %v2051 = vpop.f32.mrb[0].mxu0
      %v2052 = vadd.f32 %v1949, %v2051
      %v2053 = vpop.f32.mrb[0].mxu0
      %v2054 = vadd.f32 %v1951, %v2053
      %2055 = vmatprep.mubr.bf16.mxu0 %v717
      %2056 = vmatmul.mubr.bf16.gmra.mrb[0].mxu0 %v716
      %v2057 = vpop.f32.mrb[0].mxu0
      %v2058 = vadd.f32 %v1955, %v2057
      %v2059 = vpop.f32.mrb[0].mxu0
      %v2060 = vadd.f32 %v1957, %v2059
      %v2061 = vpop.f32.mrb[0].mxu0
      %v2062 = vadd.f32 %v1959, %v2061
      %v2063 = vpop.f32.mrb[0].mxu0
      %v2064 = vadd.f32 %v1961, %v2063
      %2065 = vmatprep.mubr.bf16.mxu0 %v728
      %2066 = vmatmul.mubr.bf16.gmra.mrb[0].mxu0 %v727
      %v2067 = vpop.f32.mrb[0].mxu0
      %v2068 = vadd.f32 %v1965, %v2067
      %v2069 = vpop.f32.mrb[0].mxu0
      %v2070 = vadd.f32 %v1967, %v2069
      %v2071 = vpop.f32.mrb[0].mxu0
      %v2072 = vadd.f32 %v1969, %v2071
      %v2073 = vpop.f32.mrb[0].mxu0
      %v2074 = vadd.f32 %v1971, %v2073
      %2075 = vmatprep.mubr.bf16.mxu0 %v739
      %2076 = vmatmul.mubr.bf16.gmra.mrb[0].mxu0 %v738
      %v2077 = vpop.f32.mrb[0].mxu0
      %v2078 = vadd.f32 %v1975, %v2077
      %v2079 = vpop.f32.mrb[0].mxu0
      %v2080 = vadd.f32 %v1977, %v2079
      %v2081 = vpop.f32.mrb[0].mxu0
      %v2082 = vadd.f32 %v1979, %v2081
      %v2083 = vpop.f32.mrb[0].mxu0
      %v2084 = vadd.f32 %v1981, %v2083
      %2085 = vmatprep.mubr.bf16.mxu0 %v750
      %2086 = vmatmul.mubr.bf16.gmra.mrb[0].mxu0 %v749
      %v2087 = vpop.f32.mrb[0].mxu0
      %v2088 = vadd.f32 %v1985, %v2087
      %v2089 = vpop.f32.mrb[0].mxu0
      %v2090 = vadd.f32 %v1987, %v2089
      %v2091 = vpop.f32.mrb[0].mxu0
      %v2092 = vadd.f32 %v1989, %v2091
      %v2093 = vpop.f32.mrb[0].mxu0
      %v2094 = vadd.f32 %v1991, %v2093
      %2095 = vmatprep.mubr.bf16.mxu0 %v761
      %2096 = vmatmul.mubr.bf16.gmra.mrb[0].mxu0 %v760
      %v2097 = vpop.f32.mrb[0].mxu0
      %v2098 = vadd.f32 %v1995, %v2097
      %v2099 = vpop.f32.mrb[0].mxu0
      %v2100 = vadd.f32 %v1997, %v2099
      %v2101 = vpop.f32.mrb[0].mxu0
      %v2102 = vadd.f32 %v1999, %v2101
      %v2103 = vpop.f32.mrb[0].mxu0
      %v2104 = vadd.f32 %v2001, %v2103
      %2105 = vdwg.mxu0
      %2106 = vmatprep.subr.bf16.mxu0 %v1536
      %2107 = vmatpush1.bf16.msra.mxu0 %v1535
      %2108 = vmatprep.subr.bf16.mxu0 %v1538
      %2109 = vmatpush1.bf16.msra.mxu0 %v1537
      %2110 = vmatprep.subr.bf16.mxu0 %v1540
      %2111 = vmatpush1.bf16.msra.mxu0 %v1539
      %2112 = vmatprep.subr.bf16.mxu0 %v1542
      %2113 = vmatpush1.bf16.msra.mxu0 %v1541
      %2114 = vmatprep.subr.bf16.mxu0 %v1544
      %2115 = vmatpush1.bf16.msra.mxu0 %v1543
      %2116 = vmatprep.subr.bf16.mxu0 %v1546
      %2117 = vmatpush1.bf16.msra.mxu0 %v1545
      %2118 = vmatprep.subr.bf16.mxu0 %v1548
      %2119 = vmatpush1.bf16.msra.mxu0 %v1547
      %2120 = vmatprep.subr.bf16.mxu0 %v1550
      %2121 = vmatpush1.bf16.msra.mxu0 %v1549
      %2122 = vmatprep.subr.bf16.mxu0 %v1552
      %2123 = vmatpush1.bf16.msra.mxu0 %v1551
      %2124 = vmatprep.subr.bf16.mxu0 %v1554
      %2125 = vmatpush1.bf16.msra.mxu0 %v1553
      %2126 = vmatprep.subr.bf16.mxu0 %v1556
      %2127 = vmatpush1.bf16.msra.mxu0 %v1555
      %2128 = vmatprep.subr.bf16.mxu0 %v1558
      %2129 = vmatpush1.bf16.msra.mxu0 %v1557
      %2130 = vmatprep.subr.bf16.mxu0 %v1560
      %2131 = vmatpush1.bf16.msra.mxu0 %v1559
      %2132 = vmatprep.subr.bf16.mxu0 %v1562
      %2133 = vmatpush1.bf16.msra.mxu0 %v1561
      %2134 = vmatprep.subr.bf16.mxu0 %v1564
      %2135 = vmatpush1.bf16.msra.mxu0 %v1563
      %2136 = vmatprep.subr.bf16.mxu0 %v1566
      %2137 = vmatpush1.bf16.msra.mxu0 %v1565
      %2138 = vmatprep.mubr.bf16.mxu0 %v697
      %2139 = vmatmul.mubr.bf16.gmra.mrb[0].mxu0 %v696
      %v2140 = vpop.f32.mrb[0].mxu0
      %v2141 = vadd.f32 %v2038, %v2140
      %v2142 = vpop.f32.mrb[0].mxu0
      %v2143 = vadd.f32 %v2040, %v2142
      %v2144 = vpop.f32.mrb[0].mxu0
      %v2145 = vadd.f32 %v2042, %v2144
      %v2146 = vpop.f32.mrb[0].mxu0
      %v2147 = vadd.f32 %v2044, %v2146
      %2148 = vmatprep.mubr.bf16.mxu0 %v708
      %2149 = vmatmul.mubr.bf16.gmra.mrb[0].mxu0 %v707
      %v2150 = vpop.f32.mrb[0].mxu0
      %v2151 = vadd.f32 %v2048, %v2150
      %v2152 = vpop.f32.mrb[0].mxu0
      %v2153 = vadd.f32 %v2050, %v2152
      %v2154 = vpop.f32.mrb[0].mxu0
      %v2155 = vadd.f32 %v2052, %v2154
      %v2156 = vpop.f32.mrb[0].mxu0
      %v2157 = vadd.f32 %v2054, %v2156
      %2158 = vmatprep.mubr.bf16.mxu0 %v719
      %2159 = vmatmul.mubr.bf16.gmra.mrb[0].mxu0 %v718
      %v2160 = vpop.f32.mrb[0].mxu0
      %v2161 = vadd.f32 %v2058, %v2160
      %v2162 = vpop.f32.mrb[0].mxu0
      %v2163 = vadd.f32 %v2060, %v2162
      %v2164 = vpop.f32.mrb[0].mxu0
      %v2165 = vadd.f32 %v2062, %v2164
      %v2166 = vpop.f32.mrb[0].mxu0
      %v2167 = vadd.f32 %v2064, %v2166
      %2168 = vmatprep.mubr.bf16.mxu0 %v730
      %2169 = vmatmul.mubr.bf16.gmra.mrb[0].mxu0 %v729
      %v2170 = vpop.f32.mrb[0].mxu0
      %v2171 = vadd.f32 %v2068, %v2170
      %v2172 = vpop.f32.mrb[0].mxu0
      %v2173 = vadd.f32 %v2070, %v2172
      %v2174 = vpop.f32.mrb[0].mxu0
      %v2175 = vadd.f32 %v2072, %v2174
      %v2176 = vpop.f32.mrb[0].mxu0
      %v2177 = vadd.f32 %v2074, %v2176
      %2178 = vmatprep.mubr.bf16.mxu0 %v741
      %2179 = vmatmul.mubr.bf16.gmra.mrb[0].mxu0 %v740
      %v2180 = vpop.f32.mrb[0].mxu0
      %v2181 = vadd.f32 %v2078, %v2180
      %v2182 = vpop.f32.mrb[0].mxu0
      %v2183 = vadd.f32 %v2080, %v2182
      %v2184 = vpop.f32.mrb[0].mxu0
      %v2185 = vadd.f32 %v2082, %v2184
      %v2186 = vpop.f32.mrb[0].mxu0
      %v2187 = vadd.f32 %v2084, %v2186
      %2188 = vmatprep.mubr.bf16.mxu0 %v752
      %2189 = vmatmul.mubr.bf16.gmra.mrb[0].mxu0 %v751
      %v2190 = vpop.f32.mrb[0].mxu0
      %v2191 = vadd.f32 %v2088, %v2190
      %v2192 = vpop.f32.mrb[0].mxu0
      %v2193 = vadd.f32 %v2090, %v2192
      %v2194 = vpop.f32.mrb[0].mxu0
      %v2195 = vadd.f32 %v2092, %v2194
      %v2196 = vpop.f32.mrb[0].mxu0
      %v2197 = vadd.f32 %v2094, %v2196
      %2198 = vmatprep.mubr.bf16.mxu0 %v763
      %2199 = vmatmul.mubr.bf16.gmra.mrb[0].mxu0 %v762
      %v2200 = vpop.f32.mrb[0].mxu0
      %v2201 = vadd.f32 %v2098, %v2200
      %v2202 = vpop.f32.mrb[0].mxu0
      %v2203 = vadd.f32 %v2100, %v2202
      %v2204 = vpop.f32.mrb[0].mxu0
      %v2205 = vadd.f32 %v2102, %v2204
      %v2206 = vpop.f32.mrb[0].mxu0
      %v2207 = vadd.f32 %v2104, %v2206
      %2208 = vdwg.mxu0
      %2209 = vmatprep.subr.bf16.mxu0 %v1568
      %2210 = vmatpush1.bf16.msra.mxu0 %v1567
      %2211 = vmatprep.subr.bf16.mxu0 %v1570
      %2212 = vmatpush1.bf16.msra.mxu0 %v1569
      %2213 = vmatprep.subr.bf16.mxu0 %v1572
      %2214 = vmatpush1.bf16.msra.mxu0 %v1571
      %2215 = vmatprep.subr.bf16.mxu0 %v1574
      %2216 = vmatpush1.bf16.msra.mxu0 %v1573
      %2217 = vmatprep.subr.bf16.mxu0 %v1576
      %2218 = vmatpush1.bf16.msra.mxu0 %v1575
      %2219 = vmatprep.subr.bf16.mxu0 %v1578
      %2220 = vmatpush1.bf16.msra.mxu0 %v1577
      %2221 = vmatprep.subr.bf16.mxu0 %v1580
      %2222 = vmatpush1.bf16.msra.mxu0 %v1579
      %2223 = vmatprep.subr.bf16.mxu0 %v1582
      %2224 = vmatpush1.bf16.msra.mxu0 %v1581
      %2225 = vmatprep.subr.bf16.mxu0 %v1584
      %2226 = vmatpush1.bf16.msra.mxu0 %v1583
      %2227 = vmatprep.subr.bf16.mxu0 %v1586
      %2228 = vmatpush1.bf16.msra.mxu0 %v1585
      %2229 = vmatprep.subr.bf16.mxu0 %v1588
      %2230 = vmatpush1.bf16.msra.mxu0 %v1587
      %2231 = vmatprep.subr.bf16.mxu0 %v1590
      %2232 = vmatpush1.bf16.msra.mxu0 %v1589
      %2233 = vmatprep.subr.bf16.mxu0 %v1592
      %2234 = vmatpush1.bf16.msra.mxu0 %v1591
      %2235 = vmatprep.subr.bf16.mxu0 %v1594
      %2236 = vmatpush1.bf16.msra.mxu0 %v1593
      %2237 = vmatprep.subr.bf16.mxu0 %v1596
      %2238 = vmatpush1.bf16.msra.mxu0 %v1595
      %2239 = vmatprep.subr.bf16.mxu0 %v1598
      %2240 = vmatpush1.bf16.msra.mxu0 %v1597
      %2241 = vmatprep.mubr.bf16.mxu0 %v699
      %2242 = vmatmul.mubr.bf16.gmra.mrb[0].mxu0 %v698
      %v2243 = vpop.f32.mrb[0].mxu0
      %v2244 = vadd.f32 %v2141, %v2243
      %v2245 = vpop.f32.mrb[0].mxu0
      %v2246 = vadd.f32 %v2143, %v2245
      %v2247 = vpop.f32.mrb[0].mxu0
      %v2248 = vadd.f32 %v2145, %v2247
      %v2249 = vpop.f32.mrb[0].mxu0
      %v2250 = vadd.f32 %v2147, %v2249
      %2251 = vmatprep.mubr.bf16.mxu0 %v710
      %2252 = vmatmul.mubr.bf16.gmra.mrb[0].mxu0 %v709
      %v2253 = vpop.f32.mrb[0].mxu0
      %v2254 = vadd.f32 %v2151, %v2253
      %v2255 = vpop.f32.mrb[0].mxu0
      %v2256 = vadd.f32 %v2153, %v2255
      %v2257 = vpop.f32.mrb[0].mxu0
      %v2258 = vadd.f32 %v2155, %v2257
      %v2259 = vpop.f32.mrb[0].mxu0
      %v2260 = vadd.f32 %v2157, %v2259
      %2261 = vmatprep.mubr.bf16.mxu0 %v721
      %2262 = vmatmul.mubr.bf16.gmra.mrb[0].mxu0 %v720
      %v2263 = vpop.f32.mrb[0].mxu0
      %v2264 = vadd.f32 %v2161, %v2263
      %v2265 = vpop.f32.mrb[0].mxu0
      %v2266 = vadd.f32 %v2163, %v2265
      %v2267 = vpop.f32.mrb[0].mxu0
      %v2268 = vadd.f32 %v2165, %v2267
      %v2269 = vpop.f32.mrb[0].mxu0
      %v2270 = vadd.f32 %v2167, %v2269
      %2271 = vmatprep.mubr.bf16.mxu0 %v732
      %2272 = vmatmul.mubr.bf16.gmra.mrb[0].mxu0 %v731
      %v2273 = vpop.f32.mrb[0].mxu0
      %v2274 = vadd.f32 %v2171, %v2273
      %v2275 = vpop.f32.mrb[0].mxu0
      %v2276 = vadd.f32 %v2173, %v2275
      %v2277 = vpop.f32.mrb[0].mxu0
      %v2278 = vadd.f32 %v2175, %v2277
      %v2279 = vpop.f32.mrb[0].mxu0
      %v2280 = vadd.f32 %v2177, %v2279
      %2281 = vmatprep.mubr.bf16.mxu0 %v743
      %2282 = vmatmul.mubr.bf16.gmra.mrb[0].mxu0 %v742
      %v2283 = vpop.f32.mrb[0].mxu0
      %v2284 = vadd.f32 %v2181, %v2283
      %v2285 = vpop.f32.mrb[0].mxu0
      %v2286 = vadd.f32 %v2183, %v2285
      %v2287 = vpop.f32.mrb[0].mxu0
      %v2288 = vadd.f32 %v2185, %v2287
      %v2289 = vpop.f32.mrb[0].mxu0
      %v2290 = vadd.f32 %v2187, %v2289
      %2291 = vmatprep.mubr.bf16.mxu0 %v754
      %2292 = vmatmul.mubr.bf16.gmra.mrb[0].mxu0 %v753
      %v2293 = vpop.f32.mrb[0].mxu0
      %v2294 = vadd.f32 %v2191, %v2293
      %v2295 = vpop.f32.mrb[0].mxu0
      %v2296 = vadd.f32 %v2193, %v2295
      %v2297 = vpop.f32.mrb[0].mxu0
      %v2298 = vadd.f32 %v2195, %v2297
      %v2299 = vpop.f32.mrb[0].mxu0
      %v2300 = vadd.f32 %v2197, %v2299
      %2301 = vmatprep.mubr.bf16.mxu0 %v765
      %2302 = vmatmul.mubr.bf16.gmra.mrb[0].mxu0 %v764
      %v2303 = vpop.f32.mrb[0].mxu0
      %v2304 = vadd.f32 %v2201, %v2303
      %v2305 = vpop.f32.mrb[0].mxu0
      %v2306 = vadd.f32 %v2203, %v2305
      %v2307 = vpop.f32.mrb[0].mxu0
      %v2308 = vadd.f32 %v2205, %v2307
      %v2309 = vpop.f32.mrb[0].mxu0
      %v2310 = vadd.f32 %v2207, %v2309
      %2311 = vdwg.mxu0
      %2312 = vmatprep.subr.bf16.mxu0 %v1600
      %2313 = vmatpush1.bf16.msra.mxu0 %v1599
      %2314 = vmatprep.subr.bf16.mxu0 %v1602
      %2315 = vmatpush1.bf16.msra.mxu0 %v1601
      %2316 = vmatprep.subr.bf16.mxu0 %v1604
      %2317 = vmatpush1.bf16.msra.mxu0 %v1603
      %2318 = vmatprep.subr.bf16.mxu0 %v1606
      %2319 = vmatpush1.bf16.msra.mxu0 %v1605
      %2320 = vmatprep.subr.bf16.mxu0 0
      %2321 = vmatpush1.bf16.msra.mxu0 0
      %2322 = vmatprep.subr.bf16.mxu0 0
      %2323 = vmatpush1.bf16.msra.mxu0 0
      %2324 = vmatprep.subr.bf16.mxu0 0
      %2325 = vmatpush1.bf16.msra.mxu0 0
      %2326 = vmatprep.subr.bf16.mxu0 0
      %2327 = vmatpush1.bf16.msra.mxu0 0
      %2328 = vmatprep.subr.bf16.mxu0 0
      %2329 = vmatpush1.bf16.msra.mxu0 0
      %2330 = vmatprep.subr.bf16.mxu0 0
      %2331 = vmatpush1.bf16.msra.mxu0 0
      %2332 = vmatprep.subr.bf16.mxu0 0
      %2333 = vmatpush1.bf16.msra.mxu0 0
      %2334 = vmatprep.subr.bf16.mxu0 0
      %2335 = vmatpush1.bf16.msra.mxu0 0
      %2336 = vmatprep.subr.bf16.mxu0 0
      %2337 = vmatpush1.bf16.msra.mxu0 0
      %2338 = vmatprep.subr.bf16.mxu0 0
      %2339 = vmatpush1.bf16.msra.mxu0 0
      %2340 = vmatprep.subr.bf16.mxu0 0
      %2341 = vmatpush1.bf16.msra.mxu0 0
      %2342 = vmatprep.subr.bf16.mxu0 0
      %2343 = vmatpush1.bf16.msra.mxu0 0
      %2344 = vmatprep.mubr.bf16.mxu0 0
      %2345 = vmatmul.mubr.bf16.gmra.mrb[0].mxu0 %v1777
      %v2346 = vpop.f32.mrb[0].mxu0
      %v2347 = vadd.f32 %v2244, %v2346
      %v2348 = vpop.f32.mrb[0].mxu0
      %v2349 = vadd.f32 %v2246, %v2348
      %v2350 = vpop.f32.mrb[0].mxu0
      %v2351 = vadd.f32 %v2248, %v2350
      %v2352 = vpop.f32.mrb[0].mxu0
      %v2353 = vadd.f32 %v2250, %v2352
      %2354 = vmatprep.mubr.bf16.mxu0 0
      %2355 = vmatmul.mubr.bf16.gmra.mrb[0].mxu0 %v1780
      %v2356 = vpop.f32.mrb[0].mxu0
      %v2357 = vadd.f32 %v2254, %v2356
      %v2358 = vpop.f32.mrb[0].mxu0
      %v2359 = vadd.f32 %v2256, %v2358
      %v2360 = vpop.f32.mrb[0].mxu0
      %v2361 = vadd.f32 %v2258, %v2360
      %v2362 = vpop.f32.mrb[0].mxu0
      %v2363 = vadd.f32 %v2260, %v2362
      %2364 = vmatprep.mubr.bf16.mxu0 0
      %2365 = vmatmul.mubr.bf16.gmra.mrb[0].mxu0 %v1783
      %v2366 = vpop.f32.mrb[0].mxu0
      %v2367 = vadd.f32 %v2264, %v2366
      %v2368 = vpop.f32.mrb[0].mxu0
      %v2369 = vadd.f32 %v2266, %v2368
      %v2370 = vpop.f32.mrb[0].mxu0
      %v2371 = vadd.f32 %v2268, %v2370
      %v2372 = vpop.f32.mrb[0].mxu0
      %v2373 = vadd.f32 %v2270, %v2372
      %2374 = vmatprep.mubr.bf16.mxu0 0
      %2375 = vmatmul.mubr.bf16.gmra.mrb[0].mxu0 %v1786
      %v2376 = vpop.f32.mrb[0].mxu0
      %v2377 = vadd.f32 %v2274, %v2376
      %v2378 = vpop.f32.mrb[0].mxu0
      %v2379 = vadd.f32 %v2276, %v2378
      %v2380 = vpop.f32.mrb[0].mxu0
      %v2381 = vadd.f32 %v2278, %v2380
      %v2382 = vpop.f32.mrb[0].mxu0
      %v2383 = vadd.f32 %v2280, %v2382
      %2384 = vmatprep.mubr.bf16.mxu0 0
      %2385 = vmatmul.mubr.bf16.gmra.mrb[0].mxu0 %v1789
      %v2386 = vpop.f32.mrb[0].mxu0
      %v2387 = vadd.f32 %v2284, %v2386
      %v2388 = vpop.f32.mrb[0].mxu0
      %v2389 = vadd.f32 %v2286, %v2388
      %v2390 = vpop.f32.mrb[0].mxu0
      %v2391 = vadd.f32 %v2288, %v2390
      %v2392 = vpop.f32.mrb[0].mxu0
      %v2393 = vadd.f32 %v2290, %v2392
      %2394 = vmatprep.mubr.bf16.mxu0 0
      %2395 = vmatmul.mubr.bf16.gmra.mrb[0].mxu0 %v1792
      %v2396 = vpop.f32.mrb[0].mxu0
      %v2397 = vadd.f32 %v2294, %v2396
      %v2398 = vpop.f32.mrb[0].mxu0
      %v2399 = vadd.f32 %v2296, %v2398
      %v2400 = vpop.f32.mrb[0].mxu0
      %v2401 = vadd.f32 %v2298, %v2400
      %v2402 = vpop.f32.mrb[0].mxu0
      %v2403 = vadd.f32 %v2300, %v2402
      %2404 = vmatprep.mubr.bf16.mxu0 0
      %2405 = vmatmul.mubr.bf16.gmra.mrb[0].mxu0 %v1795
      %v2406 = vpop.f32.mrb[0].mxu0
      %v2407 = vadd.f32 %v2304, %v2406
      %v2408 = vpop.f32.mrb[0].mxu0
      %v2409 = vadd.f32 %v2306, %v2408
      %v2410 = vpop.f32.mrb[0].mxu0
      %v2411 = vadd.f32 %v2308, %v2410
      %v2412 = vpop.f32.mrb[0].mxu0
      %v2413 = vadd.f32 %v2310, %v2412
      %2414 = vdwg.mxu0
      %2415 = vst [vmem:[%s236] sm:$0xff] %v2347
      %vm2416 = vcmask 556032
      %2417 = vst.msk [vmem:[%s236 + $0x8] sm:$0xff] %vm2416, %v2349
      %2418 = vst [vmem:[%s236 + $0x10] sm:$0xff] %v2351
      %2419 = vst.msk [vmem:[%s236 + $0x18] sm:$0xff] %vm2416, %v2353
      %2420 = vst [vmem:[%s236 + $0x20] sm:$0xff] %v2357
      %2421 = vst.msk [vmem:[%s236 + $0x28] sm:$0xff] %vm2416, %v2359
      %2422 = vst [vmem:[%s236 + $0x30] sm:$0xff] %v2361
      %2423 = vst.msk [vmem:[%s236 + $0x38] sm:$0xff] %vm2416, %v2363
      %2424 = vst [vmem:[%s236 + $0x40] sm:$0xff] %v2367
      %2425 = vst.msk [vmem:[%s236 + $0x48] sm:$0xff] %vm2416, %v2369
      %2426 = vst [vmem:[%s236 + $0x50] sm:$0xff] %v2371
      %2427 = vst.msk [vmem:[%s236 + $0x58] sm:$0xff] %vm2416, %v2373
      %2428 = vst [vmem:[%s236 + $0x60] sm:$0xff] %v2377
      %2429 = vst.msk [vmem:[%s236 + $0x68] sm:$0xff] %vm2416, %v2379
      %2430 = vst [vmem:[%s236 + $0x70] sm:$0xff] %v2381
      %2431 = vst.msk [vmem:[%s236 + $0x78] sm:$0xff] %vm2416, %v2383
      %2432 = vst [vmem:[%s236 + $0x80] sm:$0xff] %v2387
      %2433 = vst.msk [vmem:[%s236 + $0x88] sm:$0xff] %vm2416, %v2389
      %2434 = vst [vmem:[%s236 + $0x90] sm:$0xff] %v2391
      %2435 = vst.msk [vmem:[%s236 + $0x98] sm:$0xff] %vm2416, %v2393
      %2436 = vst [vmem:[%s236 + $0xa0] sm:$0xff] %v2397
      %2437 = vst.msk [vmem:[%s236 + $0xa8] sm:$0xff] %vm2416, %v2399
      %2438 = vst [vmem:[%s236 + $0xb0] sm:$0xff] %v2401
      %2439 = vst.msk [vmem:[%s236 + $0xb8] sm:$0xff] %vm2416, %v2403
      %2440 = vst [vmem:[%s236 + $0xc0] sm:$0xff] %v2407
      %2441 = vst.msk [vmem:[%s236 + $0xc8] sm:$0xff] %vm2416, %v2409
      %2442 = vst [vmem:[%s236 + $0xd0] sm:$0xff] %v2411
      %2443 = vst.msk [vmem:[%s236 + $0xd8] sm:$0xff] %vm2416, %v2413
      %s2444 = smul.u32 14, %s19
      %p2445 = scmp.lt.s32.totalorder %s18, 0
      %s2446 = scalar_select %p2445, %s18, 0
      %p2447 = scmp.lt.s32.totalorder %s2444, 27
      %s2448 = scalar_select %p2447, %s2444, 27
      %s2449 = smul.addr %s2448, 2
      %s2450 = smul.addr %s2446, 56
      %s2451 = sadd.s32 %s2449, %s2450
      %s2452 = smul.addr %s2451, 8
      %s2453 = scalar_lea.vmem %s3, %s2452
      // Predicated region
      $region33: #{mul_conv2d_1x1.1} parent=31 // pred_check
        %p2454 = pneg %p124
      $region34: #{mul_conv2d_1x1.1} parent=31 // pred_check_branch
        %2456 = sbr.rel (%p2454) target = $region36
      $region35: #{mul_conv2d_1x1.1} parent=31 // pred_region
        %s2457 = smul.u32 14, %s19
      $region36: #{mul_conv2d_1x1.1} parent=31 // pred_fallthru
        _
    $region32: #{mul_conv2d_1x1.1} parent=5 // pred_fallthru
      _
    %p2458 = scmp.le.s32.totalorder 2, %s9
    // Predicated region
    $region37: #{mul_conv2d_1x1.1} parent=5 // pred_check
      %p2459 = pneg %p2458
    $region38: #{mul_conv2d_1x1.1} parent=5 // pred_check_branch
      %2461 = sbr.rel (%p2459) target = $region40
    $region39: #{mul_conv2d_1x1.1} parent=5 // pred_region
      %s2462 = ssub.s32 %s9, 2
      // Predicated region
      $region41: #{mul_conv2d_1x1.1} parent=39 // pred_check
        %p2463 = pneg %p130
      $region42: #{mul_conv2d_1x1.1} parent=39 // pred_check_branch
        %2465 = sbr.rel (%p2463) target = $region44
      $region43: #{mul_conv2d_1x1.1} parent=39 // pred_region
        %s2466 = smul.u32 14, %s21
        %p2467 = scmp.lt.s32.totalorder %s20, 0
        %s2468 = scalar_select %p2467, %s20, 0
        %p2469 = scmp.lt.s32.totalorder %s2466, 27
        %s2470 = scalar_select %p2469, %s2466, 27
        %s2471 = smul.addr %s2470, 2
        %s2472 = smul.addr %s2468, 56
        %s2473 = sadd.s32 %s2471, %s2472
        %s2474 = smul.addr %s2473, 8
        %s2475 = scalar_lea.vmem %s3, %s2474
      $region44: #{mul_conv2d_1x1.1} parent=39 // pred_fallthru
        _
    $region40: #{mul_conv2d_1x1.1} parent=5 // pred_fallthru
      _
  $region6: #{mul_conv2d_1x1.1} parent=0 // loop_footer
    %s13 = sadd.s32 1, %s9
  $region7: #{mul_conv2d_1x1.1} parent=0 // loop_footer_branch
    %8 = sbr.rel target = $region3
  $region8: #{mul_conv2d_1x1.1} parent=0 // loop_exit
    _

</llo_original>
